<compile_context>
chip_gen: v7x
topology: tpu7x:2x2x1
jax: 0.10.0
libtpu: 0.0.40
codegen_flags: <defaults>
</compile_context>

<pallas_src>
import math

import jax
import jax.numpy as jnp
import numpy as np
from jax import lax
from jax.experimental import pallas as pl
from jax.experimental.pallas import tpu as pltpu


def _pick_tiling(H, W, tile_h=None):
    """Row-tile height and padded width (lane-dense: TH*Wpad % 128 == 0)."""
    if tile_h is None:
        TH = 8 if H % 8 == 0 else H
    else:
        assert H % tile_h == 0
        TH = tile_h
    mult = 128 // math.gcd(TH, 128)
    Wpad = -(-(W + 6) // mult) * mult          # >= W + 6, keeps Lout % 128 == 0
    return TH, Wpad


def _fuse_params(w_se, b_se, w_ae, b_ae, alpha_se, alpha_ae):
    """Fuse the 2x4 conv branches into one (16, 49*Cin) weight matrix.

    Row order   : branch-major, channel order [SE, AE0, AE1, AE2].
    Column order: ((sy+3)*7 + (sx+3)) * Cin + ci, sy/sx in [-3, 3].
    Smaller kernels are zero-padded into the 7x7 footprint (exactly equivalent
    to the original smaller conv).
    """
    rows, biases = [], []
    for i in range(4):
        p = i                                   # kernel size 2i+1, padding i
        w = jnp.concatenate([w_se[i], w_ae[i]], axis=0).astype(jnp.float32)
        Cin = w.shape[1]
        full = jnp.zeros((4, Cin, 7, 7), jnp.float32)
        full = full.at[:, :, 3 - p:4 + p, 3 - p:4 + p].set(w)
        rows.append(jnp.transpose(full, (0, 2, 3, 1)).reshape(4, 49 * Cin))
        biases.append(jnp.concatenate([b_se[i], b_ae[i]]))
    w_f = jnp.concatenate(rows, axis=0)                       # (16, 49*Cin)
    b16 = jnp.concatenate(biases).reshape(16, 1).astype(jnp.float32)
    alpha4 = jnp.concatenate([alpha_se, alpha_ae]).reshape(4, 1).astype(jnp.float32)
    return w_f, b16, alpha4


def _make_rt_kernel(Wpad, Lout, Cin):
    """Kernel closure over the static tiling constants."""
    D = 3 * Wpad + 3          # max |shift| of a tap in flattened coordinates

    def rt_kernel(x_ref, f_ref, w_ref, b_ref, a_ref, fc_ref, t_ref):
        # x_ref : (1, 1, 3,   Lout)   rain image at the tile's output pixels
        # f_ref : (1, 1, Cin, Lext)   flattened halo-padded feature tile
        # w_ref : (16, 49*Cin)        fused conv weights
        # b_ref : (16, 1)             per (branch, out-channel) bias
        # a_ref : (4, 1)              PReLU slopes [SE, AE0, AE1, AE2]
        # fc_ref: (1, 1, 7, Lout)     output f_c = [y_, z, a]
        # t_ref : VMEM (49*Cin, Lout) scratch tap matrix
        fvals = f_ref[0, 0]                                   # (Cin, Lext)

        # Build the 49 distinct spatial taps via static lane slices.
        for sy in range(-3, 4):
            for sx in range(-3, 4):
                s = (sy + 3) * 7 + (sx + 3)
                off = D + sy * Wpad + sx
                t_ref[s * Cin:(s + 1) * Cin, :] = fvals[:, off:off + Lout]

        # One fused GEMM: (16, 49*Cin) @ (49*Cin, Lout) -> (16, Lout).
        r = jnp.dot(w_ref[...], t_ref[...],
                    preferred_element_type=jnp.float32)
        r = r + b_ref[...]

        # Pyramid maxout over the 4 conv branches (per output channel).
        m = jnp.maximum(jnp.maximum(r[0:4], r[4:8]),
                        jnp.maximum(r[8:12], r[12:16]))       # (4, Lout)

        # PReLU with per-channel slope.
        alpha = a_ref[...]                                    # (4, 1)
        m = jnp.where(m > 0, m, m * alpha)

        # SE -> z_hat (clamped to [0,1]);  AE -> a_hat.
        z = jnp.clip(m[0:1], 0.0, 1.0)                        # (1, Lout)
        ah = m[1:4]                                           # (3, Lout)

        # Recovery formula.
        x = x_ref[0, 0]                                       # (3, Lout)
        lt1 = (z < 1.0).astype(jnp.float32)
        eq1 = (z == 1.0).astype(jnp.float32)
        inv = pl.reciprocal(1.0 - z + 1e-8, approx=True)
        y = lt1 * (x - ah * z) * inv + eq1 * x
        y = jnp.clip(y, 0.0, 1.0)

        # Single lane-dense write of f_c = cat([y_, z, a]).
        fc_ref[0, 0] = jnp.concatenate([y, z, ah], axis=0)    # (7, Lout)

    return rt_kernel


def r_t_forward(x, f_t, params, tile_h=None):
    """x: (N,3,H,W), f_t: (N,Cin,H,W), NCHW.  Returns (y_, f_c, z_hat, a_hat) NCHW."""
    w_se, b_se, w_ae, b_ae, alpha_se, alpha_ae = params
    N, _, H, W = x.shape
    Cin = f_t.shape[1]

    TH, Wpad = _pick_tiling(H, W, tile_h)
    nt = H // TH
    Lout = TH * Wpad                       # lane extent per output tile
    Lext = (TH + 6) * Wpad + 6             # lane extent of the haloed feature tile
    Kf = 49 * Cin

    w_f, b16, alpha4 = _fuse_params(w_se, b_se, w_ae, b_ae, alpha_se, alpha_ae)

    # --- glue (plain JAX): pad, build halo row-tiles, flatten spatial dims ---
    f_pad = jnp.pad(f_t, ((0, 0), (0, 0), (3, 3), (3, Wpad - W - 3)))
    x_pad = jnp.pad(x,   ((0, 0), (0, 0), (3, 3), (3, Wpad - W - 3)))
    f_tiles = jnp.stack([f_pad[:, :, i * TH:i * TH + TH + 6, :] for i in range(nt)],
                        axis=1)                                # (N, nt, Cin, TH+6, Wpad)
    f_ext = jnp.pad(f_tiles.reshape(N, nt, Cin, (TH + 6) * Wpad),
                    ((0, 0), (0, 0), (0, 0), (3, 3)))          # (N, nt, Cin, Lext)
    x_tiles = jnp.stack([x_pad[:, :, i * TH + 3:i * TH + 3 + TH, :] for i in range(nt)],
                        axis=1)                                # (N, nt, 3, TH, Wpad)
    x_flat = x_tiles.reshape(N, nt, 3, Lout)

    kernel = _make_rt_kernel(Wpad, Lout, Cin)

    grid_spec = pltpu.PrefetchScalarGridSpec(
        num_scalar_prefetch=0,
        grid=(N, nt),
        in_specs=[
            pl.BlockSpec((1, 1, 3, Lout), lambda n, i: (n, i, 0, 0)),    # x tile
            pl.BlockSpec((1, 1, Cin, Lext), lambda n, i: (n, i, 0, 0)),  # feature tile
            pl.BlockSpec((16, Kf), lambda n, i: (0, 0)),                 # fused weights
            pl.BlockSpec((16, 1), lambda n, i: (0, 0)),                  # bias
            pl.BlockSpec((4, 1), lambda n, i: (0, 0)),                   # PReLU alpha
        ],
        out_specs=pl.BlockSpec((1, 1, 7, Lout), lambda n, i: (n, i, 0, 0)),
        scratch_shapes=[pltpu.VMEM((Kf, Lout), jnp.float32)],
    )

    fc_flat = pl.pallas_call(
        kernel,
        out_shape=jax.ShapeDtypeStruct((N, nt, 7, Lout), jnp.float32),
        grid_spec=grid_spec,
        compiler_params=pltpu.CompilerParams(
            dimension_semantics=("parallel", "parallel"),
            vmem_limit_bytes=32 * 1024 * 1024),
    )(x_flat, f_ext, w_f, b16, alpha4)

    # --- glue: un-tile, strip width padding, split heads out of f_c ---
    fc = fc_flat.reshape(N, nt, 7, TH, Wpad)
    fc = jnp.transpose(fc, (0, 2, 1, 3, 4)).reshape(N, 7, H, Wpad)[:, :, :, 3:3 + W]
    y_ = fc[:, 0:3]
    z_hat = fc[:, 3:4]
    a_hat = fc[:, 4:7]
    return y_, fc, z_hat, a_hat


def _reference_heads(f_t, params):
    """Pure-JAX reference for the Pyramid_maxout heads (z_hat, a_hat)."""
    w_se, b_se, w_ae, b_ae, alpha_se, alpha_ae = params
    outs = []
    for i in range(4):
        p = i
        w = jnp.concatenate([w_se[i], w_ae[i]], axis=0)        # (4, Cin, k, k) OIHW
        b = jnp.concatenate([b_se[i], b_ae[i]])
        o = lax.conv_general_dilated(
            f_t, w, window_strides=(1, 1), padding=((p, p), (p, p)),
            dimension_numbers=('NCHW', 'OIHW', 'NCHW'))
        outs.append(o + b[None, :, None, None])
    r = jnp.max(jnp.stack(outs, axis=0), axis=0)
    al = jnp.concatenate([alpha_se, alpha_ae])[None, :, None, None]
    r = jnp.where(r > 0, r, r * al)
    z_hat = jnp.clip(r[:, 0:1], 0.0, 1.0)
    a_hat = r[:, 1:4]
    return z_hat, a_hat


if __name__ == "__main__":
    # Small, module-consistent shapes: x has 3 channels, f_t has Cin features.
    N, Cin, H, W = 2, 8, 16, 16

    key = jax.random.PRNGKey(0)
    keys = jax.random.split(key, 20)
    w_se, b_se, w_ae, b_ae = [], [], [], []
    kc = 0
    for i in range(4):
        k = 2 * i + 1
        w_se.append(jax.random.normal(keys[kc], (1, Cin, k, k), jnp.float32) * 0.05); kc += 1
        b_se.append(jax.random.normal(keys[kc], (1,), jnp.float32) * 0.01); kc += 1
        w_ae.append(jax.random.normal(keys[kc], (3, Cin, k, k), jnp.float32) * 0.05); kc += 1
        b_ae.append(jax.random.normal(keys[kc], (3,), jnp.float32) * 0.01); kc += 1
    alpha_se = jnp.full((1,), 0.25, jnp.float32)     # PyTorch PReLU default init
    alpha_ae = jnp.full((3,), 0.25, jnp.float32)
    params = (w_se, b_se, w_ae, b_ae, alpha_se, alpha_ae)

    x = jax.random.uniform(keys[16], (N, 3, H, W), jnp.float32)   # image in [0,1]
    f_t = jax.random.normal(keys[17], (N, Cin, H, W), jnp.float32)

    y_, f_c, z_hat, a_hat = r_t_forward(x, f_t, params)
    jax.block_until_ready((y_, f_c, z_hat, a_hat))

    # Verify the conv/maxout/PReLU heads against a pure-JAX reference.
    z_ref, a_ref = _reference_heads(f_t, params)
    np.testing.assert_allclose(np.asarray(z_hat), np.asarray(z_ref),
                               rtol=1e-4, atol=1e-4)
    np.testing.assert_allclose(np.asarray(a_hat), np.asarray(a_ref),
                               rtol=1e-4, atol=1e-4)

    assert y_.shape == (N, 3, H, W)
    assert f_c.shape == (N, 7, H, W)
    assert z_hat.shape == (N, 1, H, W)
    assert a_hat.shape == (N, 3, H, W)
    print("KERNEL_OK")
</pallas_src>

<mosaic_0001>
module attributes {stable_mosaic.version = 11 : i64} {
  func.func @rt_kernel(%arg0: i32, %arg1: i32, %arg2: memref<1x1x3x256xf32, #tpu.memory_space<vmem>>, %arg3: memref<1x1x8x454xf32, #tpu.memory_space<vmem>>, %arg4: memref<16x392xf32, #tpu.memory_space<vmem>>, %arg5: memref<16x1xf32, #tpu.memory_space<vmem>>, %arg6: memref<4x1xf32, #tpu.memory_space<vmem>>, %arg7: memref<1x1x7x256xf32, #tpu.memory_space<vmem>>, %arg8: memref<392x256xf32, #tpu.memory_space<vmem>>) attributes {dimension_semantics = [#tpu.dimension_semantics<parallel>, #tpu.dimension_semantics<parallel>], iteration_bounds = array<i64: 2, 2>, scalar_prefetch = 0 : i64, scratch_operands = 1 : i64, tpu.core_type = #tpu.core_type<tc>, window_params = [{transform_indices = @transform_0, window_bounds = array<i64: 1, 1, 3, 256>}, {transform_indices = @transform_1, window_bounds = array<i64: 1, 1, 8, 454>}, {pipeline_mode = #tpu.pipeline_mode<synchronous>, transform_indices = @transform_2, window_bounds = array<i64: 16, 392>}, {pipeline_mode = #tpu.pipeline_mode<synchronous>, transform_indices = @transform_3, window_bounds = array<i64: 16, 1>}, {pipeline_mode = #tpu.pipeline_mode<synchronous>, transform_indices = @transform_4, window_bounds = array<i64: 4, 1>}, {transform_indices = @transform_5, window_bounds = array<i64: 1, 1, 7, 256>}]} {
    %c0 = arith.constant 0 : index
    %c0_0 = arith.constant 0 : index
    %c0_1 = arith.constant 0 : index
    %c0_2 = arith.constant 0 : index
    %0 = vector.load %arg3[%c0, %c0_0, %c0_1, %c0_2] : memref<1x1x8x454xf32, #tpu.memory_space<vmem>>, vector<1x1x8x454xf32>
    %1 = vector.shape_cast %0 : vector<1x1x8x454xf32> to vector<8x454xf32>
    %2 = vector.extract_strided_slice %1 {offsets = [0, 0], sizes = [8, 256], strides = [1, 1]} : vector<8x454xf32> to vector<8x256xf32>
    %c0_3 = arith.constant 0 : index
    %c0_4 = arith.constant 0 : index
    %3 = vector.load %arg8[%c0_3, %c0_4] : memref<392x256xf32, #tpu.memory_space<vmem>>, vector<8x256xf32>
    tpu.vector_store %arg8[%c0_3, %c0_4], %2 {strides = array<i32>} : memref<392x256xf32, #tpu.memory_space<vmem>>, vector<8x256xf32>,
    %4 = vector.extract_strided_slice %1 {offsets = [0, 1], sizes = [8, 256], strides = [1, 1]} : vector<8x454xf32> to vector<8x256xf32>
    %c8 = arith.constant 8 : index
    %c0_5 = arith.constant 0 : index
    %5 = vector.load %arg8[%c8, %c0_5] : memref<392x256xf32, #tpu.memory_space<vmem>>, vector<8x256xf32>
    tpu.vector_store %arg8[%c8, %c0_5], %4 {strides = array<i32>} : memref<392x256xf32, #tpu.memory_space<vmem>>, vector<8x256xf32>,
    %6 = vector.extract_strided_slice %1 {offsets = [0, 2], sizes = [8, 256], strides = [1, 1]} : vector<8x454xf32> to vector<8x256xf32>
    %c16 = arith.constant 16 : index
    %c0_6 = arith.constant 0 : index
    %7 = vector.load %arg8[%c16, %c0_6] : memref<392x256xf32, #tpu.memory_space<vmem>>, vector<8x256xf32>
    tpu.vector_store %arg8[%c16, %c0_6], %6 {strides = array<i32>} : memref<392x256xf32, #tpu.memory_space<vmem>>, vector<8x256xf32>,
    %8 = vector.extract_strided_slice %1 {offsets = [0, 3], sizes = [8, 256], strides = [1, 1]} : vector<8x454xf32> to vector<8x256xf32>
    %c24 = arith.constant 24 : index
    %c0_7 = arith.constant 0 : index
    %9 = vector.load %arg8[%c24, %c0_7] : memref<392x256xf32, #tpu.memory_space<vmem>>, vector<8x256xf32>
    tpu.vector_store %arg8[%c24, %c0_7], %8 {strides = array<i32>} : memref<392x256xf32, #tpu.memory_space<vmem>>, vector<8x256xf32>,
    %10 = vector.extract_strided_slice %1 {offsets = [0, 4], sizes = [8, 256], strides = [1, 1]} : vector<8x454xf32> to vector<8x256xf32>
    %c32 = arith.constant 32 : index
    %c0_8 = arith.constant 0 : index
    %11 = vector.load %arg8[%c32, %c0_8] : memref<392x256xf32, #tpu.memory_space<vmem>>, vector<8x256xf32>
    tpu.vector_store %arg8[%c32, %c0_8], %10 {strides = array<i32>} : memref<392x256xf32, #tpu.memory_space<vmem>>, vector<8x256xf32>,
    %12 = vector.extract_strided_slice %1 {offsets = [0, 5], sizes = [8, 256], strides = [1, 1]} : vector<8x454xf32> to vector<8x256xf32>
    %c40 = arith.constant 40 : index
    %c0_9 = arith.constant 0 : index
    %13 = vector.load %arg8[%c40, %c0_9] : memref<392x256xf32, #tpu.memory_space<vmem>>, vector<8x256xf32>
    tpu.vector_store %arg8[%c40, %c0_9], %12 {strides = array<i32>} : memref<392x256xf32, #tpu.memory_space<vmem>>, vector<8x256xf32>,
    %14 = vector.extract_strided_slice %1 {offsets = [0, 6], sizes = [8, 256], strides = [1, 1]} : vector<8x454xf32> to vector<8x256xf32>
    %c48 = arith.constant 48 : index
    %c0_10 = arith.constant 0 : index
    %15 = vector.load %arg8[%c48, %c0_10] : memref<392x256xf32, #tpu.memory_space<vmem>>, vector<8x256xf32>
    tpu.vector_store %arg8[%c48, %c0_10], %14 {strides = array<i32>} : memref<392x256xf32, #tpu.memory_space<vmem>>, vector<8x256xf32>,
    %16 = vector.extract_strided_slice %1 {offsets = [0, 32], sizes = [8, 256], strides = [1, 1]} : vector<8x454xf32> to vector<8x256xf32>
    %c56 = arith.constant 56 : index
    %c0_11 = arith.constant 0 : index
    %17 = vector.load %arg8[%c56, %c0_11] : memref<392x256xf32, #tpu.memory_space<vmem>>, vector<8x256xf32>
    tpu.vector_store %arg8[%c56, %c0_11], %16 {strides = array<i32>} : memref<392x256xf32, #tpu.memory_space<vmem>>, vector<8x256xf32>,
    %18 = vector.extract_strided_slice %1 {offsets = [0, 33], sizes = [8, 256], strides = [1, 1]} : vector<8x454xf32> to vector<8x256xf32>
    %c64 = arith.constant 64 : index
    %c0_12 = arith.constant 0 : index
    %19 = vector.load %arg8[%c64, %c0_12] : memref<392x256xf32, #tpu.memory_space<vmem>>, vector<8x256xf32>
    tpu.vector_store %arg8[%c64, %c0_12], %18 {strides = array<i32>} : memref<392x256xf32, #tpu.memory_space<vmem>>, vector<8x256xf32>,
    %20 = vector.extract_strided_slice %1 {offsets = [0, 34], sizes = [8, 256], strides = [1, 1]} : vector<8x454xf32> to vector<8x256xf32>
    %c72 = arith.constant 72 : index
    %c0_13 = arith.constant 0 : index
    %21 = vector.load %arg8[%c72, %c0_13] : memref<392x256xf32, #tpu.memory_space<vmem>>, vector<8x256xf32>
    tpu.vector_store %arg8[%c72, %c0_13], %20 {strides = array<i32>} : memref<392x256xf32, #tpu.memory_space<vmem>>, vector<8x256xf32>,
    %22 = vector.extract_strided_slice %1 {offsets = [0, 35], sizes = [8, 256], strides = [1, 1]} : vector<8x454xf32> to vector<8x256xf32>
    %c80 = arith.constant 80 : index
    %c0_14 = arith.constant 0 : index
    %23 = vector.load %arg8[%c80, %c0_14] : memref<392x256xf32, #tpu.memory_space<vmem>>, vector<8x256xf32>
    tpu.vector_store %arg8[%c80, %c0_14], %22 {strides = array<i32>} : memref<392x256xf32, #tpu.memory_space<vmem>>, vector<8x256xf32>,
    %24 = vector.extract_strided_slice %1 {offsets = [0, 36], sizes = [8, 256], strides = [1, 1]} : vector<8x454xf32> to vector<8x256xf32>
    %c88 = arith.constant 88 : index
    %c0_15 = arith.constant 0 : index
    %25 = vector.load %arg8[%c88, %c0_15] : memref<392x256xf32, #tpu.memory_space<vmem>>, vector<8x256xf32>
    tpu.vector_store %arg8[%c88, %c0_15], %24 {strides = array<i32>} : memref<392x256xf32, #tpu.memory_space<vmem>>, vector<8x256xf32>,
    %26 = vector.extract_strided_slice %1 {offsets = [0, 37], sizes = [8, 256], strides = [1, 1]} : vector<8x454xf32> to vector<8x256xf32>
    %c96 = arith.constant 96 : index
    %c0_16 = arith.constant 0 : index
    %27 = vector.load %arg8[%c96, %c0_16] : memref<392x256xf32, #tpu.memory_space<vmem>>, vector<8x256xf32>
    tpu.vector_store %arg8[%c96, %c0_16], %26 {strides = array<i32>} : memref<392x256xf32, #tpu.memory_space<vmem>>, vector<8x256xf32>,
    %28 = vector.extract_strided_slice %1 {offsets = [0, 38], sizes = [8, 256], strides = [1, 1]} : vector<8x454xf32> to vector<8x256xf32>
    %c104 = arith.constant 104 : index
    %c0_17 = arith.constant 0 : index
    %29 = vector.load %arg8[%c104, %c0_17] : memref<392x256xf32, #tpu.memory_space<vmem>>, vector<8x256xf32>
    tpu.vector_store %arg8[%c104, %c0_17], %28 {strides = array<i32>} : memref<392x256xf32, #tpu.memory_space<vmem>>, vector<8x256xf32>,
    %30 = vector.extract_strided_slice %1 {offsets = [0, 64], sizes = [8, 256], strides = [1, 1]} : vector<8x454xf32> to vector<8x256xf32>
    %c112 = arith.constant 112 : index
    %c0_18 = arith.constant 0 : index
    %31 = vector.load %arg8[%c112, %c0_18] : memref<392x256xf32, #tpu.memory_space<vmem>>, vector<8x256xf32>
    tpu.vector_store %arg8[%c112, %c0_18], %30 {strides = array<i32>} : memref<392x256xf32, #tpu.memory_space<vmem>>, vector<8x256xf32>,
    %32 = vector.extract_strided_slice %1 {offsets = [0, 65], sizes = [8, 256], strides = [1, 1]} : vector<8x454xf32> to vector<8x256xf32>
    %c120 = arith.constant 120 : index
    %c0_19 = arith.constant 0 : index
    %33 = vector.load %arg8[%c120, %c0_19] : memref<392x256xf32, #tpu.memory_space<vmem>>, vector<8x256xf32>
    tpu.vector_store %arg8[%c120, %c0_19], %32 {strides = array<i32>} : memref<392x256xf32, #tpu.memory_space<vmem>>, vector<8x256xf32>,
    %34 = vector.extract_strided_slice %1 {offsets = [0, 66], sizes = [8, 256], strides = [1, 1]} : vector<8x454xf32> to vector<8x256xf32>
    %c128 = arith.constant 128 : index
    %c0_20 = arith.constant 0 : index
    %35 = vector.load %arg8[%c128, %c0_20] : memref<392x256xf32, #tpu.memory_space<vmem>>, vector<8x256xf32>
    tpu.vector_store %arg8[%c128, %c0_20], %34 {strides = array<i32>} : memref<392x256xf32, #tpu.memory_space<vmem>>, vector<8x256xf32>,
    %36 = vector.extract_strided_slice %1 {offsets = [0, 67], sizes = [8, 256], strides = [1, 1]} : vector<8x454xf32> to vector<8x256xf32>
    %c136 = arith.constant 136 : index
    %c0_21 = arith.constant 0 : index
    %37 = vector.load %arg8[%c136, %c0_21] : memref<392x256xf32, #tpu.memory_space<vmem>>, vector<8x256xf32>
    tpu.vector_store %arg8[%c136, %c0_21], %36 {strides = array<i32>} : memref<392x256xf32, #tpu.memory_space<vmem>>, vector<8x256xf32>,
    %38 = vector.extract_strided_slice %1 {offsets = [0, 68], sizes = [8, 256], strides = [1, 1]} : vector<8x454xf32> to vector<8x256xf32>
    %c144 = arith.constant 144 : index
    %c0_22 = arith.constant 0 : index
    %39 = vector.load %arg8[%c144, %c0_22] : memref<392x256xf32, #tpu.memory_space<vmem>>, vector<8x256xf32>
    tpu.vector_store %arg8[%c144, %c0_22], %38 {strides = array<i32>} : memref<392x256xf32, #tpu.memory_space<vmem>>, vector<8x256xf32>,
    %40 = vector.extract_strided_slice %1 {offsets = [0, 69], sizes = [8, 256], strides = [1, 1]} : vector<8x454xf32> to vector<8x256xf32>
    %c152 = arith.constant 152 : index
    %c0_23 = arith.constant 0 : index
    %41 = vector.load %arg8[%c152, %c0_23] : memref<392x256xf32, #tpu.memory_space<vmem>>, vector<8x256xf32>
    tpu.vector_store %arg8[%c152, %c0_23], %40 {strides = array<i32>} : memref<392x256xf32, #tpu.memory_space<vmem>>, vector<8x256xf32>,
    %42 = vector.extract_strided_slice %1 {offsets = [0, 70], sizes = [8, 256], strides = [1, 1]} : vector<8x454xf32> to vector<8x256xf32>
    %c160 = arith.constant 160 : index
    %c0_24 = arith.constant 0 : index
    %43 = vector.load %arg8[%c160, %c0_24] : memref<392x256xf32, #tpu.memory_space<vmem>>, vector<8x256xf32>
    tpu.vector_store %arg8[%c160, %c0_24], %42 {strides = array<i32>} : memref<392x256xf32, #tpu.memory_space<vmem>>, vector<8x256xf32>,
    %44 = vector.extract_strided_slice %1 {offsets = [0, 96], sizes = [8, 256], strides = [1, 1]} : vector<8x454xf32> to vector<8x256xf32>
    %c168 = arith.constant 168 : index
    %c0_25 = arith.constant 0 : index
    %45 = vector.load %arg8[%c168, %c0_25] : memref<392x256xf32, #tpu.memory_space<vmem>>, vector<8x256xf32>
    tpu.vector_store %arg8[%c168, %c0_25], %44 {strides = array<i32>} : memref<392x256xf32, #tpu.memory_space<vmem>>, vector<8x256xf32>,
    %46 = vector.extract_strided_slice %1 {offsets = [0, 97], sizes = [8, 256], strides = [1, 1]} : vector<8x454xf32> to vector<8x256xf32>
    %c176 = arith.constant 176 : index
    %c0_26 = arith.constant 0 : index
    %47 = vector.load %arg8[%c176, %c0_26] : memref<392x256xf32, #tpu.memory_space<vmem>>, vector<8x256xf32>
    tpu.vector_store %arg8[%c176, %c0_26], %46 {strides = array<i32>} : memref<392x256xf32, #tpu.memory_space<vmem>>, vector<8x256xf32>,
    %48 = vector.extract_strided_slice %1 {offsets = [0, 98], sizes = [8, 256], strides = [1, 1]} : vector<8x454xf32> to vector<8x256xf32>
    %c184 = arith.constant 184 : index
    %c0_27 = arith.constant 0 : index
    %49 = vector.load %arg8[%c184, %c0_27] : memref<392x256xf32, #tpu.memory_space<vmem>>, vector<8x256xf32>
    tpu.vector_store %arg8[%c184, %c0_27], %48 {strides = array<i32>} : memref<392x256xf32, #tpu.memory_space<vmem>>, vector<8x256xf32>,
    %50 = vector.extract_strided_slice %1 {offsets = [0, 99], sizes = [8, 256], strides = [1, 1]} : vector<8x454xf32> to vector<8x256xf32>
    %c192 = arith.constant 192 : index
    %c0_28 = arith.constant 0 : index
    %51 = vector.load %arg8[%c192, %c0_28] : memref<392x256xf32, #tpu.memory_space<vmem>>, vector<8x256xf32>
    tpu.vector_store %arg8[%c192, %c0_28], %50 {strides = array<i32>} : memref<392x256xf32, #tpu.memory_space<vmem>>, vector<8x256xf32>,
    %52 = vector.extract_strided_slice %1 {offsets = [0, 100], sizes = [8, 256], strides = [1, 1]} : vector<8x454xf32> to vector<8x256xf32>
    %c200 = arith.constant 200 : index
    %c0_29 = arith.constant 0 : index
    %53 = vector.load %arg8[%c200, %c0_29] : memref<392x256xf32, #tpu.memory_space<vmem>>, vector<8x256xf32>
    tpu.vector_store %arg8[%c200, %c0_29], %52 {strides = array<i32>} : memref<392x256xf32, #tpu.memory_space<vmem>>, vector<8x256xf32>,
    %54 = vector.extract_strided_slice %1 {offsets = [0, 101], sizes = [8, 256], strides = [1, 1]} : vector<8x454xf32> to vector<8x256xf32>
    %c208 = arith.constant 208 : index
    %c0_30 = arith.constant 0 : index
    %55 = vector.load %arg8[%c208, %c0_30] : memref<392x256xf32, #tpu.memory_space<vmem>>, vector<8x256xf32>
    tpu.vector_store %arg8[%c208, %c0_30], %54 {strides = array<i32>} : memref<392x256xf32, #tpu.memory_space<vmem>>, vector<8x256xf32>,
    %56 = vector.extract_strided_slice %1 {offsets = [0, 102], sizes = [8, 256], strides = [1, 1]} : vector<8x454xf32> to vector<8x256xf32>
    %c216 = arith.constant 216 : index
    %c0_31 = arith.constant 0 : index
    %57 = vector.load %arg8[%c216, %c0_31] : memref<392x256xf32, #tpu.memory_space<vmem>>, vector<8x256xf32>
    tpu.vector_store %arg8[%c216, %c0_31], %56 {strides = array<i32>} : memref<392x256xf32, #tpu.memory_space<vmem>>, vector<8x256xf32>,
    %58 = vector.extract_strided_slice %1 {offsets = [0, 128], sizes = [8, 256], strides = [1, 1]} : vector<8x454xf32> to vector<8x256xf32>
    %c224 = arith.constant 224 : index
    %c0_32 = arith.constant 0 : index
    %59 = vector.load %arg8[%c224, %c0_32] : memref<392x256xf32, #tpu.memory_space<vmem>>, vector<8x256xf32>
    tpu.vector_store %arg8[%c224, %c0_32], %58 {strides = array<i32>} : memref<392x256xf32, #tpu.memory_space<vmem>>, vector<8x256xf32>,
    %60 = vector.extract_strided_slice %1 {offsets = [0, 129], sizes = [8, 256], strides = [1, 1]} : vector<8x454xf32> to vector<8x256xf32>
    %c232 = arith.constant 232 : index
    %c0_33 = arith.constant 0 : index
    %61 = vector.load %arg8[%c232, %c0_33] : memref<392x256xf32, #tpu.memory_space<vmem>>, vector<8x256xf32>
    tpu.vector_store %arg8[%c232, %c0_33], %60 {strides = array<i32>} : memref<392x256xf32, #tpu.memory_space<vmem>>, vector<8x256xf32>,
    %62 = vector.extract_strided_slice %1 {offsets = [0, 130], sizes = [8, 256], strides = [1, 1]} : vector<8x454xf32> to vector<8x256xf32>
    %c240 = arith.constant 240 : index
    %c0_34 = arith.constant 0 : index
    %63 = vector.load %arg8[%c240, %c0_34] : memref<392x256xf32, #tpu.memory_space<vmem>>, vector<8x256xf32>
    tpu.vector_store %arg8[%c240, %c0_34], %62 {strides = array<i32>} : memref<392x256xf32, #tpu.memory_space<vmem>>, vector<8x256xf32>,
    %64 = vector.extract_strided_slice %1 {offsets = [0, 131], sizes = [8, 256], strides = [1, 1]} : vector<8x454xf32> to vector<8x256xf32>
    %c248 = arith.constant 248 : index
    %c0_35 = arith.constant 0 : index
    %65 = vector.load %arg8[%c248, %c0_35] : memref<392x256xf32, #tpu.memory_space<vmem>>, vector<8x256xf32>
    tpu.vector_store %arg8[%c248, %c0_35], %64 {strides = array<i32>} : memref<392x256xf32, #tpu.memory_space<vmem>>, vector<8x256xf32>,
    %66 = vector.extract_strided_slice %1 {offsets = [0, 132], sizes = [8, 256], strides = [1, 1]} : vector<8x454xf32> to vector<8x256xf32>
    %c256 = arith.constant 256 : index
    %c0_36 = arith.constant 0 : index
    %67 = vector.load %arg8[%c256, %c0_36] : memref<392x256xf32, #tpu.memory_space<vmem>>, vector<8x256xf32>
    tpu.vector_store %arg8[%c256, %c0_36], %66 {strides = array<i32>} : memref<392x256xf32, #tpu.memory_space<vmem>>, vector<8x256xf32>,
    %68 = vector.extract_strided_slice %1 {offsets = [0, 133], sizes = [8, 256], strides = [1, 1]} : vector<8x454xf32> to vector<8x256xf32>
    %c264 = arith.constant 264 : index
    %c0_37 = arith.constant 0 : index
    %69 = vector.load %arg8[%c264, %c0_37] : memref<392x256xf32, #tpu.memory_space<vmem>>, vector<8x256xf32>
    tpu.vector_store %arg8[%c264, %c0_37], %68 {strides = array<i32>} : memref<392x256xf32, #tpu.memory_space<vmem>>, vector<8x256xf32>,
    %70 = vector.extract_strided_slice %1 {offsets = [0, 134], sizes = [8, 256], strides = [1, 1]} : vector<8x454xf32> to vector<8x256xf32>
    %c272 = arith.constant 272 : index
    %c0_38 = arith.constant 0 : index
    %71 = vector.load %arg8[%c272, %c0_38] : memref<392x256xf32, #tpu.memory_space<vmem>>, vector<8x256xf32>
    tpu.vector_store %arg8[%c272, %c0_38], %70 {strides = array<i32>} : memref<392x256xf32, #tpu.memory_space<vmem>>, vector<8x256xf32>,
    %72 = vector.extract_strided_slice %1 {offsets = [0, 160], sizes = [8, 256], strides = [1, 1]} : vector<8x454xf32> to vector<8x256xf32>
    %c280 = arith.constant 280 : index
    %c0_39 = arith.constant 0 : index
    %73 = vector.load %arg8[%c280, %c0_39] : memref<392x256xf32, #tpu.memory_space<vmem>>, vector<8x256xf32>
    tpu.vector_store %arg8[%c280, %c0_39], %72 {strides = array<i32>} : memref<392x256xf32, #tpu.memory_space<vmem>>, vector<8x256xf32>,
    %74 = vector.extract_strided_slice %1 {offsets = [0, 161], sizes = [8, 256], strides = [1, 1]} : vector<8x454xf32> to vector<8x256xf32>
    %c288 = arith.constant 288 : index
    %c0_40 = arith.constant 0 : index
    %75 = vector.load %arg8[%c288, %c0_40] : memref<392x256xf32, #tpu.memory_space<vmem>>, vector<8x256xf32>
    tpu.vector_store %arg8[%c288, %c0_40], %74 {strides = array<i32>} : memref<392x256xf32, #tpu.memory_space<vmem>>, vector<8x256xf32>,
    %76 = vector.extract_strided_slice %1 {offsets = [0, 162], sizes = [8, 256], strides = [1, 1]} : vector<8x454xf32> to vector<8x256xf32>
    %c296 = arith.constant 296 : index
    %c0_41 = arith.constant 0 : index
    %77 = vector.load %arg8[%c296, %c0_41] : memref<392x256xf32, #tpu.memory_space<vmem>>, vector<8x256xf32>
    tpu.vector_store %arg8[%c296, %c0_41], %76 {strides = array<i32>} : memref<392x256xf32, #tpu.memory_space<vmem>>, vector<8x256xf32>,
    %78 = vector.extract_strided_slice %1 {offsets = [0, 163], sizes = [8, 256], strides = [1, 1]} : vector<8x454xf32> to vector<8x256xf32>
    %c304 = arith.constant 304 : index
    %c0_42 = arith.constant 0 : index
    %79 = vector.load %arg8[%c304, %c0_42] : memref<392x256xf32, #tpu.memory_space<vmem>>, vector<8x256xf32>
    tpu.vector_store %arg8[%c304, %c0_42], %78 {strides = array<i32>} : memref<392x256xf32, #tpu.memory_space<vmem>>, vector<8x256xf32>,
    %80 = vector.extract_strided_slice %1 {offsets = [0, 164], sizes = [8, 256], strides = [1, 1]} : vector<8x454xf32> to vector<8x256xf32>
    %c312 = arith.constant 312 : index
    %c0_43 = arith.constant 0 : index
    %81 = vector.load %arg8[%c312, %c0_43] : memref<392x256xf32, #tpu.memory_space<vmem>>, vector<8x256xf32>
    tpu.vector_store %arg8[%c312, %c0_43], %80 {strides = array<i32>} : memref<392x256xf32, #tpu.memory_space<vmem>>, vector<8x256xf32>,
    %82 = vector.extract_strided_slice %1 {offsets = [0, 165], sizes = [8, 256], strides = [1, 1]} : vector<8x454xf32> to vector<8x256xf32>
    %c320 = arith.constant 320 : index
    %c0_44 = arith.constant 0 : index
    %83 = vector.load %arg8[%c320, %c0_44] : memref<392x256xf32, #tpu.memory_space<vmem>>, vector<8x256xf32>
    tpu.vector_store %arg8[%c320, %c0_44], %82 {strides = array<i32>} : memref<392x256xf32, #tpu.memory_space<vmem>>, vector<8x256xf32>,
    %84 = vector.extract_strided_slice %1 {offsets = [0, 166], sizes = [8, 256], strides = [1, 1]} : vector<8x454xf32> to vector<8x256xf32>
    %c328 = arith.constant 328 : index
    %c0_45 = arith.constant 0 : index
    %85 = vector.load %arg8[%c328, %c0_45] : memref<392x256xf32, #tpu.memory_space<vmem>>, vector<8x256xf32>
    tpu.vector_store %arg8[%c328, %c0_45], %84 {strides = array<i32>} : memref<392x256xf32, #tpu.memory_space<vmem>>, vector<8x256xf32>,
    %86 = vector.extract_strided_slice %1 {offsets = [0, 192], sizes = [8, 256], strides = [1, 1]} : vector<8x454xf32> to vector<8x256xf32>
    %c336 = arith.constant 336 : index
    %c0_46 = arith.constant 0 : index
    %87 = vector.load %arg8[%c336, %c0_46] : memref<392x256xf32, #tpu.memory_space<vmem>>, vector<8x256xf32>
    tpu.vector_store %arg8[%c336, %c0_46], %86 {strides = array<i32>} : memref<392x256xf32, #tpu.memory_space<vmem>>, vector<8x256xf32>,
    %88 = vector.extract_strided_slice %1 {offsets = [0, 193], sizes = [8, 256], strides = [1, 1]} : vector<8x454xf32> to vector<8x256xf32>
    %c344 = arith.constant 344 : index
    %c0_47 = arith.constant 0 : index
    %89 = vector.load %arg8[%c344, %c0_47] : memref<392x256xf32, #tpu.memory_space<vmem>>, vector<8x256xf32>
    tpu.vector_store %arg8[%c344, %c0_47], %88 {strides = array<i32>} : memref<392x256xf32, #tpu.memory_space<vmem>>, vector<8x256xf32>,
    %90 = vector.extract_strided_slice %1 {offsets = [0, 194], sizes = [8, 256], strides = [1, 1]} : vector<8x454xf32> to vector<8x256xf32>
    %c352 = arith.constant 352 : index
    %c0_48 = arith.constant 0 : index
    %91 = vector.load %arg8[%c352, %c0_48] : memref<392x256xf32, #tpu.memory_space<vmem>>, vector<8x256xf32>
    tpu.vector_store %arg8[%c352, %c0_48], %90 {strides = array<i32>} : memref<392x256xf32, #tpu.memory_space<vmem>>, vector<8x256xf32>,
    %92 = vector.extract_strided_slice %1 {offsets = [0, 195], sizes = [8, 256], strides = [1, 1]} : vector<8x454xf32> to vector<8x256xf32>
    %c360 = arith.constant 360 : index
    %c0_49 = arith.constant 0 : index
    %93 = vector.load %arg8[%c360, %c0_49] : memref<392x256xf32, #tpu.memory_space<vmem>>, vector<8x256xf32>
    tpu.vector_store %arg8[%c360, %c0_49], %92 {strides = array<i32>} : memref<392x256xf32, #tpu.memory_space<vmem>>, vector<8x256xf32>,
    %94 = vector.extract_strided_slice %1 {offsets = [0, 196], sizes = [8, 256], strides = [1, 1]} : vector<8x454xf32> to vector<8x256xf32>
    %c368 = arith.constant 368 : index
    %c0_50 = arith.constant 0 : index
    %95 = vector.load %arg8[%c368, %c0_50] : memref<392x256xf32, #tpu.memory_space<vmem>>, vector<8x256xf32>
    tpu.vector_store %arg8[%c368, %c0_50], %94 {strides = array<i32>} : memref<392x256xf32, #tpu.memory_space<vmem>>, vector<8x256xf32>,
    %96 = vector.extract_strided_slice %1 {offsets = [0, 197], sizes = [8, 256], strides = [1, 1]} : vector<8x454xf32> to vector<8x256xf32>
    %c376 = arith.constant 376 : index
    %c0_51 = arith.constant 0 : index
    %97 = vector.load %arg8[%c376, %c0_51] : memref<392x256xf32, #tpu.memory_space<vmem>>, vector<8x256xf32>
    tpu.vector_store %arg8[%c376, %c0_51], %96 {strides = array<i32>} : memref<392x256xf32, #tpu.memory_space<vmem>>, vector<8x256xf32>,
    %98 = vector.extract_strided_slice %1 {offsets = [0, 198], sizes = [8, 256], strides = [1, 1]} : vector<8x454xf32> to vector<8x256xf32>
    %c384 = arith.constant 384 : index
    %c0_52 = arith.constant 0 : index
    %99 = vector.load %arg8[%c384, %c0_52] : memref<392x256xf32, #tpu.memory_space<vmem>>, vector<8x256xf32>
    tpu.vector_store %arg8[%c384, %c0_52], %98 {strides = array<i32>} : memref<392x256xf32, #tpu.memory_space<vmem>>, vector<8x256xf32>,
    %c0_53 = arith.constant 0 : index
    %c0_54 = arith.constant 0 : index
    %100 = vector.load %arg4[%c0_53, %c0_54] : memref<16x392xf32, #tpu.memory_space<vmem>>, vector<16x392xf32>
    %c0_55 = arith.constant 0 : index
    %c0_56 = arith.constant 0 : index
    %101 = vector.load %arg8[%c0_55, %c0_56] : memref<392x256xf32, #tpu.memory_space<vmem>>, vector<392x256xf32>
    %cst = arith.constant dense<0.000000e+00> : vector<16x256xf32>
    %102 = tpu.matmul %100, %101, %cst {dimension_numbers = #tpu.dot_dimension_numbers<[1], [0], [0], [1], [0, 0, 1, 1], [], []>} : vector<16x392xf32>, vector<392x256xf32>, vector<16x256xf32> -> vector<16x256xf32>
    %c0_57 = arith.constant 0 : index
    %c0_58 = arith.constant 0 : index
    %103 = vector.load %arg5[%c0_57, %c0_58] : memref<16x1xf32, #tpu.memory_space<vmem>>, vector<16x1xf32>
    %104 = vector.broadcast %103 : vector<16x1xf32> to vector<16x256xf32>
    %105 = arith.addf %102, %104 : vector<16x256xf32>
    %106 = vector.extract_strided_slice %105 {offsets = [0, 0], sizes = [4, 256], strides = [1, 1]} : vector<16x256xf32> to vector<4x256xf32>
    %107 = vector.extract_strided_slice %105 {offsets = [4, 0], sizes = [4, 256], strides = [1, 1]} : vector<16x256xf32> to vector<4x256xf32>
    %108 = arith.maximumf %106, %107 : vector<4x256xf32>
    %109 = vector.extract_strided_slice %105 {offsets = [8, 0], sizes = [4, 256], strides = [1, 1]} : vector<16x256xf32> to vector<4x256xf32>
    %110 = vector.extract_strided_slice %105 {offsets = [12, 0], sizes = [4, 256], strides = [1, 1]} : vector<16x256xf32> to vector<4x256xf32>
    %111 = arith.maximumf %109, %110 : vector<4x256xf32>
    %112 = arith.maximumf %108, %111 : vector<4x256xf32>
    %c0_59 = arith.constant 0 : index
    %c0_60 = arith.constant 0 : index
    %113 = vector.load %arg6[%c0_59, %c0_60] : memref<4x1xf32, #tpu.memory_space<vmem>>, vector<4x1xf32>
    %cst_61 = arith.constant 0.000000e+00 : f32
    %114 = vector.broadcast %cst_61 : f32 to vector<4x256xf32>
    %115 = arith.cmpf ogt, %112, %114 : vector<4x256xf32>
    %116 = vector.broadcast %113 : vector<4x1xf32> to vector<4x256xf32>
    %117 = arith.mulf %112, %116 : vector<4x256xf32>
    %118 = arith.select %115, %112, %117 : vector<4x256xi1>, vector<4x256xf32>
    %119 = vector.extract_strided_slice %118 {offsets = [0, 0], sizes = [1, 256], strides = [1, 1]} : vector<4x256xf32> to vector<1x256xf32>
    %cst_62 = arith.constant 0.000000e+00 : f32
    %cst_63 = arith.constant 1.000000e+00 : f32
    %120 = vector.broadcast %cst_62 : f32 to vector<1x256xf32>
    %121 = arith.maximumf %120, %119 : vector<1x256xf32>
    %122 = vector.broadcast %cst_63 : f32 to vector<1x256xf32>
    %123 = arith.minimumf %122, %121 : vector<1x256xf32>
    %124 = vector.extract_strided_slice %118 {offsets = [1, 0], sizes = [3, 256], strides = [1, 1]} : vector<4x256xf32> to vector<3x256xf32>
    %c0_64 = arith.constant 0 : index
    %c0_65 = arith.constant 0 : index
    %c0_66 = arith.constant 0 : index
    %c0_67 = arith.constant 0 : index
    %125 = vector.load %arg2[%c0_64, %c0_65, %c0_66, %c0_67] : memref<1x1x3x256xf32, #tpu.memory_space<vmem>>, vector<1x1x3x256xf32>
    %126 = vector.shape_cast %125 : vector<1x1x3x256xf32> to vector<3x256xf32>
    %cst_68 = arith.constant 1.000000e+00 : f32
    %127 = vector.broadcast %cst_68 : f32 to vector<1x256xf32>
    %128 = arith.cmpf olt, %123, %127 : vector<1x256xf32>
    %129 = arith.extui %128 : vector<1x256xi1> to vector<1x256xi32>
    %130 = arith.sitofp %129 : vector<1x256xi32> to vector<1x256xf32>
    %cst_69 = arith.constant 1.000000e+00 : f32
    %131 = vector.broadcast %cst_69 : f32 to vector<1x256xf32>
    %132 = arith.cmpf oeq, %123, %131 : vector<1x256xf32>
    %133 = arith.extui %132 : vector<1x256xi1> to vector<1x256xi32>
    %134 = arith.sitofp %133 : vector<1x256xi32> to vector<1x256xf32>
    %cst_70 = arith.constant 1.000000e+00 : f32
    %135 = vector.broadcast %cst_70 : f32 to vector<1x256xf32>
    %136 = arith.subf %135, %123 : vector<1x256xf32>
    %cst_71 = arith.constant 9.99999993E-9 : f32
    %137 = vector.broadcast %cst_71 : f32 to vector<1x256xf32>
    %138 = arith.addf %136, %137 : vector<1x256xf32>
    %139 = tpu.reciprocal %138 {approx = true} : vector<1x256xf32> -> vector<1x256xf32>
    %140 = vector.broadcast %123 : vector<1x256xf32> to vector<3x256xf32>
    %141 = arith.mulf %124, %140 : vector<3x256xf32>
    %142 = arith.subf %126, %141 : vector<3x256xf32>
    %143 = vector.broadcast %130 : vector<1x256xf32> to vector<3x256xf32>
    %144 = arith.mulf %143, %142 : vector<3x256xf32>
    %145 = vector.broadcast %139 : vector<1x256xf32> to vector<3x256xf32>
    %146 = arith.mulf %144, %145 : vector<3x256xf32>
    %147 = vector.broadcast %134 : vector<1x256xf32> to vector<3x256xf32>
    %148 = arith.mulf %147, %126 : vector<3x256xf32>
    %149 = arith.addf %146, %148 : vector<3x256xf32>
    %cst_72 = arith.constant 0.000000e+00 : f32
    %cst_73 = arith.constant 1.000000e+00 : f32
    %150 = vector.broadcast %cst_72 : f32 to vector<3x256xf32>
    %151 = arith.maximumf %150, %149 : vector<3x256xf32>
    %152 = vector.broadcast %cst_73 : f32 to vector<3x256xf32>
    %153 = arith.minimumf %152, %151 : vector<3x256xf32>
    %154 = tpu.concatenate %153, %123, %124 in 0 : vector<3x256xf32>, vector<1x256xf32>, vector<3x256xf32> -> vector<7x256xf32>
    %c0_74 = arith.constant 0 : index
    %c0_75 = arith.constant 0 : index
    %c0_76 = arith.constant 0 : index
    %c0_77 = arith.constant 0 : index
    %155 = vector.load %arg7[%c0_74, %c0_75, %c0_76, %c0_77] : memref<1x1x7x256xf32, #tpu.memory_space<vmem>>, vector<1x1x7x256xf32>
    %156 = vector.shape_cast %155 : vector<1x1x7x256xf32> to vector<7x256xf32>
    %157 = vector.shape_cast %154 : vector<7x256xf32> to vector<1x1x7x256xf32>
    tpu.vector_store %arg7[%c0_74, %c0_75, %c0_76, %c0_77], %157 {strides = array<i32>} : memref<1x1x7x256xf32, #tpu.memory_space<vmem>>, vector<1x1x7x256xf32>,
    return
  }
  func.func @transform_0(%arg0: i32, %arg1: i32) -> (i32, i32, i32, i32) {
    %c0_i32 = arith.constant 0 : i32
    %c0_i32_0 = arith.constant 0 : i32
    %c0_i32_1 = arith.constant 0 : i32
    return %arg0, %arg1, %c0_i32, %c0_i32_0 : i32, i32, i32, i32
  }
  func.func @transform_1(%arg0: i32, %arg1: i32) -> (i32, i32, i32, i32) {
    %c0_i32 = arith.constant 0 : i32
    %c0_i32_0 = arith.constant 0 : i32
    %c0_i32_1 = arith.constant 0 : i32
    return %arg0, %arg1, %c0_i32, %c0_i32_0 : i32, i32, i32, i32
  }
  func.func @transform_2(%arg0: i32, %arg1: i32) -> (i32, i32) {
    %c0_i32 = arith.constant 0 : i32
    %c0_i32_0 = arith.constant 0 : i32
    %c0_i32_1 = arith.constant 0 : i32
    return %c0_i32, %c0_i32_0 : i32, i32
  }
  func.func @transform_3(%arg0: i32, %arg1: i32) -> (i32, i32) {
    %c0_i32 = arith.constant 0 : i32
    %c0_i32_0 = arith.constant 0 : i32
    %c0_i32_1 = arith.constant 0 : i32
    return %c0_i32, %c0_i32_0 : i32, i32
  }
  func.func @transform_4(%arg0: i32, %arg1: i32) -> (i32, i32) {
    %c0_i32 = arith.constant 0 : i32
    %c0_i32_0 = arith.constant 0 : i32
    %c0_i32_1 = arith.constant 0 : i32
    return %c0_i32, %c0_i32_0 : i32, i32
  }
  func.func @transform_5(%arg0: i32, %arg1: i32) -> (i32, i32, i32, i32) {
    %c0_i32 = arith.constant 0 : i32
    %c0_i32_0 = arith.constant 0 : i32
    %c0_i32_1 = arith.constant 0 : i32
    return %arg0, %arg1, %c0_i32, %c0_i32_0 : i32, i32, i32, i32
  }
}

</mosaic_0001>

<llo_original>
// kernel: tpu_custom_call.1
$region0: #{tpu_custom_call.1}
  #allocation0 [shape = 'u32[]', space=smem, size = 0x4, offset = 0x4, fixed_abs, tag = 'smem constant byte address 0x4 - core index']
  #allocation1 [shape = 'u32[144,128]{1,0:T(1,128)}', space=vmem, size = 0x12000, scoped, tag = 'internal scratch']
  #allocation2 [shape = 'f32[392,256]{1,0:T(8,128)}', space=vmem, size = 0x62000, scoped, tag = 'scratch operand']
  %s0 = inlined_call_operand.vmem [shape: f32[2,2,3,256], index: 0, kind: input, shape index: {}]
  %s1 = inlined_call_operand.hbm [shape: f32[2,2,8,454], index: 1, kind: input, shape index: {}]
  %s2 = inlined_call_operand.vmem [shape: f32[16,392], index: 2, kind: input, shape index: {}]
  %s3 = inlined_call_operand.vmem [shape: f32[16,1], index: 3, kind: input, shape index: {}]
  %s4 = inlined_call_operand.vmem [shape: f32[4,1], index: 4, kind: input, shape index: {}]
  %s5 = inlined_call_operand.vmem [shape: f32[2,2,7,256], index: 5, kind: output, shape index: {}]
  %s6 = sld [smem:[#allocation0]]
  $region57: #{tpu_custom_call.1} parent=0
    _
  %s8 = ssub.s32 1, %s6
  %s9 = scalar_select 0, %s8, %s6
  $region1: #{tpu_custom_call.1} parent=0
    #allocation3 [shape = 'u8[32768]{0}', space=vmem, size = 0x8000, scoped, tag = 'input window, operand 1']
    #allocation4 [shape = 's32[2]{0}', space=sflag, size = 0x8, scoped, tag = 'scoped memory for tpu_custom_call.1']
    %10 = vsyncpa [#allocation4], 0
    %s11 = scalar_lea.sflag [#allocation4], 1
    %12 = vsyncpa %s11, 0
    loop: start=0, step=1, limit=6
    $region2: #{tpu_custom_call.1} parent=1 // loop_pre_header
      _
    $region3: #{tpu_custom_call.1} parent=1 // loop_header
      %s14 = sphi 0, %s18
      %p15 = scmp.ge.s32.totalorder %s14, 6
      %s21 = sphi 0, %s33
      %s22 = sphi 0, %s29
      %s23 = sphi 0, %s21
      %s24 = sphi 0, %s22
      %s25 = sphi 0, %s23
      %s26 = sphi 0, %s24
      %s38 = sphi 0, %s40
      %s41 = sphi 0, %s38
      %s42 = sphi 0, %s41
      %s58 = sphi 0, %s42
      %s66 = sphi 0, %s68
      %s69 = sphi 0, %s66
      %s70 = sphi 0, %s69
      %s86 = sphi 0, %s70
      %s90 = sphi 0, %s90
      %s92 = sphi 0, %s90
      %s93 = sphi 0, %s92
      %s107 = sphi 0, %s93
      %s111 = sphi 0, %s111
      %s113 = sphi 0, %s111
      %s114 = sphi 0, %s113
      %s128 = sphi 0, %s114
      %s132 = sphi 0, %s132
      %s134 = sphi 0, %s132
      %s135 = sphi 0, %s134
      %s149 = sphi 0, %s135
      %s157 = sphi 0, %s159
      %s160 = sphi 0, %s157
      %s161 = sphi 0, %s160
      %s177 = sphi 0, %s161
    $region4: #{tpu_custom_call.1} parent=1 // loop_header_branch
      %17 = sbr.rel (%p15) target = $region8
    $region5: #{tpu_custom_call.1} parent=1 // loop_body
      %s19 = ssub.s32 %s14, 1
      %s20 = ssub.s32 %s14, 2
      %s27 = sadd.s32 1, %s22
      %p28 = scmp.ge.s32.totalorder %s27, 2
      %s29 = scalar_select %p28, 0, %s27
      %s30 = sadd.s32 1, %s21
      %s31 = scalar_select %p28, %s30, %s21
      %p32 = scmp.ge.s32.totalorder %s31, 2
      %s33 = scalar_select %p32, 0, %s31
      %s34 = ssub.s32 %s21, %s33
      %s35 = ssub.s32 %s22, %s29
      %s36 = sor.u32 %s34, %s35
      %p37 = scmp.eq.s32.totalorder %s36, 0
      %s39 = sadd.s32 %s38, 1
      %s40 = scalar_select %p37, %s38, %s39
      %p43 = pneg %p37
      %p44 = scmp.eq.s32.totalorder %s14, 3
      %p45 = por %p43, %p44
      %p46 = scmp.ne.s32.totalorder %s38, %s41
      %p47 = scmp.eq.s32.totalorder %s14, 0
      %p48 = por %p46, %p47
      %p49 = scmp.ne.s32.totalorder %s38, %s41
      %p50 = scmp.eq.s32.totalorder %s19, 3
      %p51 = por %p49, %p50
      %p52 = scmp.ne.s32.totalorder %s41, %s42
      %p53 = scmp.eq.s32.totalorder %s19, 0
      %p54 = por %p52, %p53
      %p55 = scmp.ne.s32.totalorder %s41, %s42
      %p56 = scmp.eq.s32.totalorder %s20, 3
      %p57 = por %p55, %p56
      %p59 = scmp.ne.s32.totalorder %s42, %s58
      %p60 = scmp.eq.s32.totalorder %s20, 0
      %p61 = por %p59, %p60
      %s62 = ssub.s32 %s21, %s33
      %s63 = ssub.s32 %s22, %s29
      %s64 = sor.u32 %s62, %s63
      %p65 = scmp.eq.s32.totalorder %s64, 0
      %s67 = sadd.s32 %s66, 1
      %s68 = scalar_select %p65, %s66, %s67
      %p71 = pneg %p65
      %p72 = scmp.eq.s32.totalorder %s14, 3
      %p73 = por %p71, %p72
      %p74 = scmp.ne.s32.totalorder %s66, %s69
      %p75 = scmp.eq.s32.totalorder %s14, 0
      %p76 = por %p74, %p75
      %p77 = scmp.ne.s32.totalorder %s66, %s69
      %p78 = scmp.eq.s32.totalorder %s19, 3
      %p79 = por %p77, %p78
      %p80 = scmp.ne.s32.totalorder %s69, %s70
      %p81 = scmp.eq.s32.totalorder %s19, 0
      %p82 = por %p80, %p81
      %p83 = scmp.ne.s32.totalorder %s69, %s70
      %p84 = scmp.eq.s32.totalorder %s20, 3
      %p85 = por %p83, %p84
      %p87 = scmp.ne.s32.totalorder %s70, %s86
      %p88 = scmp.eq.s32.totalorder %s20, 0
      %p89 = por %p87, %p88
      %s91 = sadd.s32 %s90, 1
      %p94 = scmp.eq.s32.totalorder %s14, 3
      %p95 = scmp.ne.s32.totalorder %s90, %s92
      %p96 = scmp.eq.s32.totalorder %s14, 0
      %p97 = por %p95, %p96
      %p98 = scmp.ne.s32.totalorder %s90, %s92
      %p99 = scmp.eq.s32.totalorder %s19, 3
      %p100 = por %p98, %p99
      %p101 = scmp.ne.s32.totalorder %s92, %s93
      %p102 = scmp.eq.s32.totalorder %s19, 0
      %p103 = por %p101, %p102
      %p104 = scmp.ne.s32.totalorder %s92, %s93
      %p105 = scmp.eq.s32.totalorder %s20, 3
      %p106 = por %p104, %p105
      %p108 = scmp.ne.s32.totalorder %s93, %s107
      %p109 = scmp.eq.s32.totalorder %s20, 0
      %p110 = por %p108, %p109
      %s112 = sadd.s32 %s111, 1
      %p115 = scmp.eq.s32.totalorder %s14, 3
      %p116 = scmp.ne.s32.totalorder %s111, %s113
      %p117 = scmp.eq.s32.totalorder %s14, 0
      %p118 = por %p116, %p117
      %p119 = scmp.ne.s32.totalorder %s111, %s113
      %p120 = scmp.eq.s32.totalorder %s19, 3
      %p121 = por %p119, %p120
      %p122 = scmp.ne.s32.totalorder %s113, %s114
      %p123 = scmp.eq.s32.totalorder %s19, 0
      %p124 = por %p122, %p123
      %p125 = scmp.ne.s32.totalorder %s113, %s114
      %p126 = scmp.eq.s32.totalorder %s20, 3
      %p127 = por %p125, %p126
      %p129 = scmp.ne.s32.totalorder %s114, %s128
      %p130 = scmp.eq.s32.totalorder %s20, 0
      %p131 = por %p129, %p130
      %s133 = sadd.s32 %s132, 1
      %p136 = scmp.eq.s32.totalorder %s14, 3
      %p137 = scmp.ne.s32.totalorder %s132, %s134
      %p138 = scmp.eq.s32.totalorder %s14, 0
      %p139 = por %p137, %p138
      %p140 = scmp.ne.s32.totalorder %s132, %s134
      %p141 = scmp.eq.s32.totalorder %s19, 3
      %p142 = por %p140, %p141
      %p143 = scmp.ne.s32.totalorder %s134, %s135
      %p144 = scmp.eq.s32.totalorder %s19, 0
      %p145 = por %p143, %p144
      %p146 = scmp.ne.s32.totalorder %s134, %s135
      %p147 = scmp.eq.s32.totalorder %s20, 3
      %p148 = por %p146, %p147
      %p150 = scmp.ne.s32.totalorder %s135, %s149
      %p151 = scmp.eq.s32.totalorder %s20, 0
      %p152 = por %p150, %p151
      %s153 = ssub.s32 %s21, %s33
      %s154 = ssub.s32 %s22, %s29
      %s155 = sor.u32 %s153, %s154
      %p156 = scmp.eq.s32.totalorder %s155, 0
      %s158 = sadd.s32 %s157, 1
      %s159 = scalar_select %p156, %s157, %s158
      %p162 = pneg %p156
      %p163 = scmp.eq.s32.totalorder %s14, 3
      %p164 = por %p162, %p163
      %p165 = scmp.ne.s32.totalorder %s157, %s160
      %p166 = scmp.eq.s32.totalorder %s14, 0
      %p167 = por %p165, %p166
      %p168 = scmp.ne.s32.totalorder %s157, %s160
      %p169 = scmp.eq.s32.totalorder %s19, 3
      %p170 = por %p168, %p169
      %p171 = scmp.ne.s32.totalorder %s160, %s161
      %p172 = scmp.eq.s32.totalorder %s19, 0
      %p173 = por %p171, %p172
      %p174 = scmp.ne.s32.totalorder %s160, %s161
      %p175 = scmp.eq.s32.totalorder %s20, 3
      %p176 = por %p174, %p175
      %p178 = scmp.ne.s32.totalorder %s161, %s177
      %p179 = scmp.eq.s32.totalorder %s20, 0
      %p180 = por %p178, %p179
      %p181 = scmp.le.s32.totalorder 1, %s14
      %p182 = scmp.lt.s32.totalorder %s14, 5
      %p183 = pnand %p181, %p182
      %p184 = pneg %p183
      // Predicated region
      $region9: #{tpu_custom_call.1} parent=5 // pred_check
        _
      $region10: #{tpu_custom_call.1} parent=5 // pred_check_branch
        %186 = sbr.rel (%p183) target = $region12
      $region11: #{tpu_custom_call.1} parent=5 // pred_region
        %s187 = ssub.s32 %s14, 1
        // Predicated region
        $region13: #{tpu_custom_call.1} parent=11 // pred_check
          %p188 = pneg %p103
        $region14: #{tpu_custom_call.1} parent=11 // pred_check_branch
          %190 = sbr.rel (%p188) target = $region16
        $region15: #{tpu_custom_call.1} parent=11 // pred_region
          _
        $region16: #{tpu_custom_call.1} parent=11 // pred_fallthru
          _
        // Predicated region
        $region17: #{tpu_custom_call.1} parent=11 // pred_check
          %p191 = pneg %p124
        $region18: #{tpu_custom_call.1} parent=11 // pred_check_branch
          %193 = sbr.rel (%p191) target = $region20
        $region19: #{tpu_custom_call.1} parent=11 // pred_region
          _
        $region20: #{tpu_custom_call.1} parent=11 // pred_fallthru
          _
        // Predicated region
        $region21: #{tpu_custom_call.1} parent=11 // pred_check
          %p194 = pneg %p145
        $region22: #{tpu_custom_call.1} parent=11 // pred_check_branch
          %196 = sbr.rel (%p194) target = $region24
        $region23: #{tpu_custom_call.1} parent=11 // pred_region
          _
        $region24: #{tpu_custom_call.1} parent=11 // pred_fallthru
          _
      $region12: #{tpu_custom_call.1} parent=5 // pred_fallthru
        _
      %p197 = scmp.lt.s32.totalorder %s14, 4
      // Predicated region
      $region25: #{tpu_custom_call.1} parent=5 // pred_check
        %p198 = pneg %p197
      $region26: #{tpu_custom_call.1} parent=5 // pred_check_branch
        %200 = sbr.rel (%p198) target = $region28
      $region27: #{tpu_custom_call.1} parent=5 // pred_region
        // Predicated region
        $region29: #{tpu_custom_call.1} parent=27 // pred_check
          %p201 = pneg %p48
        $region30: #{tpu_custom_call.1} parent=27 // pred_check_branch
          %203 = sbr.rel (%p201) target = $region32
        $region31: #{tpu_custom_call.1} parent=27 // pred_region
          %p204 = scmp.lt.s32.totalorder %s21, 1
          %s205 = scalar_select %p204, %s21, 1
          %p206 = scmp.lt.s32.totalorder %s22, 1
          %s207 = scalar_select %p206, %s22, 1
          %s208 = smul.addr %s207, 2
          %s209 = smul.addr %s205, 4
          %s210 = sadd.s32 %s208, %s209
          %s211 = smul.addr %s210, 4
          %s212 = scalar_lea.vmem %s0, %s211
        $region32: #{tpu_custom_call.1} parent=27 // pred_fallthru
          _
        // Predicated region
        $region33: #{tpu_custom_call.1} parent=27 // pred_check
          %p213 = pneg %p76
        $region34: #{tpu_custom_call.1} parent=27 // pred_check_branch
          %215 = sbr.rel (%p213) target = $region36
        $region35: #{tpu_custom_call.1} parent=27 // pred_region
          %s216 = sand.u32 %s66, 1
          %s217 = scalar_lea.sflag [#allocation4], %s216
          %s218 = sand.u32 %s66, 1
          %s219 = smul.addr %s218, 32
          %s220 = scalar_lea.vmem [#allocation3], %s219
          %s222 = ssub.s32 512, 512
          %223 = vsyncadd %s217, %s222
          %s224 = smul.addr %s22, 4
          %s225 = smul.addr %s21, 8
          %s226 = sadd.s32 %s224, %s225
          %s227 = smul.addr %s226, 128
          %s228 = scalar_lea.hbm %s1, %s227
          %s230 = sshll.u32 %s220, 4
          %s231 = int_to_ptr.vmem [resolvable:$true] %s230
          %233 = dma.hbm_to_vmem [thread:$0]  %s228, 512, %s231, %s217
        $region36: #{tpu_custom_call.1} parent=27 // pred_fallthru
          _
      $region28: #{tpu_custom_call.1} parent=5 // pred_fallthru
        _
      %p234 = scmp.le.s32.totalorder 1, %s14
      %p235 = scmp.lt.s32.totalorder %s14, 5
      %p236 = pnand %p234, %p235
      %p237 = pneg %p236
      // Predicated region
      $region37: #{tpu_custom_call.1} parent=5 // pred_check
        _
      $region38: #{tpu_custom_call.1} parent=5 // pred_check_branch
        %239 = sbr.rel (%p236) target = $region40
      $region39: #{tpu_custom_call.1} parent=5 // pred_region
        %s240 = ssub.s32 %s14, 1
        %s241 = sand.u32 %s69, 1
        %s242 = scalar_lea.sflag [#allocation4], %s241
        %s243 = sand.u32 %s69, 1
        %s244 = smul.addr %s243, 32
        %s245 = scalar_lea.vmem [#allocation3], %s244
        // Predicated region
        $region41: #{tpu_custom_call.1} parent=39 // pred_check
          %p246 = pneg %p82
        $region42: #{tpu_custom_call.1} parent=39 // pred_check_branch
          %248 = sbr.rel (%p246) target = $region44
        $region43: #{tpu_custom_call.1} parent=39 // pred_region
          %249 = dma.done %s242, 512
        $region44: #{tpu_custom_call.1} parent=39 // pred_fallthru
          _
        %p250 = scmp.lt.s32.totalorder %s23, 1
        %s251 = scalar_select %p250, %s23, 1
        %p252 = scmp.lt.s32.totalorder %s24, 1
        %s253 = scalar_select %p252, %s24, 1
        %s254 = smul.addr %s253, 2
        %s255 = smul.addr %s251, 4
        %s256 = sadd.s32 %s254, %s255
        %s257 = smul.addr %s256, 4
        %s258 = scalar_lea.vmem %s0, %s257
        %p259 = pneg %p54
        %p260 = pneg %p51
        %s261 = sand.u32 %s69, 1
        %s262 = scalar_lea.sflag [#allocation4], %s261
        %s263 = sand.u32 %s69, 1
        %s264 = smul.addr %s263, 32
        %s265 = scalar_lea.vmem [#allocation3], %s264
        %p266 = pneg %p82
        %p267 = pneg %p79
        %p268 = pneg %p103
        %p269 = pneg %p100
        %p270 = pneg %p124
        %p271 = pneg %p121
        %p272 = pneg %p145
        %p273 = pneg %p142
        %p274 = pneg %p173
        %p275 = pneg %p170
        %p276 = scmp.lt.s32.totalorder %s23, 1
        %s277 = scalar_select %p276, %s23, 1
        %p278 = scmp.lt.s32.totalorder %s24, 1
        %s279 = scalar_select %p278, %s24, 1
        %s280 = smul.addr %s279, 2
        %s281 = smul.addr %s277, 4
        %s282 = sadd.s32 %s280, %s281
        %s283 = smul.addr %s282, 8
        %s284 = scalar_lea.vmem %s5, %s283
        %p285 = scmp.lt.s32.totalorder %s23, 1
        %s286 = scalar_select %p285, %s23, 1
        %p287 = scmp.lt.s32.totalorder %s24, 1
        %s288 = scalar_select %p287, %s24, 1
        %s289 = smul.addr %s288, 2
        %s290 = smul.addr %s286, 4
        %s291 = sadd.s32 %s289, %s290
        %s292 = smul.addr %s291, 4
        %s293 = scalar_lea.vmem %s0, %s292
        %p294 = scmp.lt.s32.totalorder %s23, 1
        %s295 = scalar_select %p294, %s23, 1
        %p296 = scmp.lt.s32.totalorder %s24, 1
        %s297 = scalar_select %p296, %s24, 1
        %s298 = smul.addr %s297, 2
        %s299 = smul.addr %s295, 4
        %s300 = sadd.s32 %s298, %s299
        %s301 = smul.addr %s300, 8
        %s302 = scalar_lea.vmem %s5, %s301
        %v303 = vld [vmem:[%s245] sm:$0xff]
        %v304 = vld [vmem:[%s245 + $0x8] sm:$0xff]
        %v305 = vld [vmem:[%s245 + $0x10] sm:$0xff]
        %v306 = vld [vmem:[%s245 + $0x18] sm:$0xff]
        %307 = vst [vmem:[#allocation2] sm:$0xff] %v303
        %308 = vst [vmem:[#allocation2 + $0x8] sm:$0xff] %v304
        %312 = vrot.lane.b32.xlu0 %v303, 127
        %v313 = vpop.permute.xlu0 %312
        %314 = vrot.lane.b32.xlu0 %v304, 127
        %v315 = vpop.permute.xlu0 %314
        %316 = vrot.lane.b32.xlu0 %v305, 127
        %v317 = vpop.permute.xlu0 %316
        %vm318 = vcmask 1039360
        %v319 = vsel %vm318, %v313, %v315
        %v320 = vsel %vm318, %v315, %v317
        %323 = vst [vmem:[#allocation2 + $0x10] sm:$0xff] %v319
        %324 = vst [vmem:[#allocation2 + $0x18] sm:$0xff] %v320
        %325 = vrot.lane.b32.xlu0 %v303, 126
        %v326 = vpop.permute.xlu0 %325
        %327 = vrot.lane.b32.xlu0 %v304, 126
        %v328 = vpop.permute.xlu0 %327
        %329 = vrot.lane.b32.xlu0 %v305, 126
        %v330 = vpop.permute.xlu0 %329
        %vm331 = vcmask 1031168
        %v332 = vsel %vm331, %v326, %v328
        %v333 = vsel %vm331, %v328, %v330
        %336 = vst [vmem:[#allocation2 + $0x20] sm:$0xff] %v332
        %337 = vst [vmem:[#allocation2 + $0x28] sm:$0xff] %v333
        %338 = vrot.lane.b32.xlu0 %v303, 125
        %v339 = vpop.permute.xlu0 %338
        %340 = vrot.lane.b32.xlu0 %v304, 125
        %v341 = vpop.permute.xlu0 %340
        %342 = vrot.lane.b32.xlu0 %v305, 125
        %v343 = vpop.permute.xlu0 %342
        %vm344 = vcmask 1022976
        %v345 = vsel %vm344, %v339, %v341
        %v346 = vsel %vm344, %v341, %v343
        %349 = vst [vmem:[#allocation2 + $0x30] sm:$0xff] %v345
        %350 = vst [vmem:[#allocation2 + $0x38] sm:$0xff] %v346
        %351 = vrot.lane.b32.xlu0 %v303, 124
        %v352 = vpop.permute.xlu0 %351
        %353 = vrot.lane.b32.xlu0 %v304, 124
        %v354 = vpop.permute.xlu0 %353
        %355 = vrot.lane.b32.xlu0 %v305, 124
        %v356 = vpop.permute.xlu0 %355
        %vm357 = vcmask 1014784
        %v358 = vsel %vm357, %v352, %v354
        %v359 = vsel %vm357, %v354, %v356
        %362 = vst [vmem:[#allocation2 + $0x40] sm:$0xff] %v358
        %363 = vst [vmem:[#allocation2 + $0x48] sm:$0xff] %v359
        %364 = vrot.lane.b32.xlu0 %v303, 123
        %v365 = vpop.permute.xlu0 %364
        %366 = vrot.lane.b32.xlu0 %v304, 123
        %v367 = vpop.permute.xlu0 %366
        %368 = vrot.lane.b32.xlu0 %v305, 123
        %v369 = vpop.permute.xlu0 %368
        %vm370 = vcmask 1006592
        %v371 = vsel %vm370, %v365, %v367
        %v372 = vsel %vm370, %v367, %v369
        %375 = vst [vmem:[#allocation2 + $0x50] sm:$0xff] %v371
        %376 = vst [vmem:[#allocation2 + $0x58] sm:$0xff] %v372
        %377 = vrot.lane.b32.xlu0 %v303, 122
        %v378 = vpop.permute.xlu0 %377
        %379 = vrot.lane.b32.xlu0 %v304, 122
        %v380 = vpop.permute.xlu0 %379
        %381 = vrot.lane.b32.xlu0 %v305, 122
        %v382 = vpop.permute.xlu0 %381
        %vm383 = vcmask 998400
        %v384 = vsel %vm383, %v378, %v380
        %v385 = vsel %vm383, %v380, %v382
        %388 = vst [vmem:[#allocation2 + $0x60] sm:$0xff] %v384
        %389 = vst [vmem:[#allocation2 + $0x68] sm:$0xff] %v385
        %390 = vrot.lane.b32.xlu0 %v303, 96
        %v391 = vpop.permute.xlu0 %390
        %392 = vrot.lane.b32.xlu0 %v304, 96
        %v393 = vpop.permute.xlu0 %392
        %394 = vrot.lane.b32.xlu0 %v305, 96
        %v395 = vpop.permute.xlu0 %394
        %vm396 = vcmask 785408
        %v397 = vsel %vm396, %v391, %v393
        %v398 = vsel %vm396, %v393, %v395
        %401 = vst [vmem:[#allocation2 + $0x70] sm:$0xff] %v397
        %402 = vst [vmem:[#allocation2 + $0x78] sm:$0xff] %v398
        %403 = vrot.lane.b32.xlu0 %v303, 95
        %v404 = vpop.permute.xlu0 %403
        %405 = vrot.lane.b32.xlu0 %v304, 95
        %v406 = vpop.permute.xlu0 %405
        %407 = vrot.lane.b32.xlu0 %v305, 95
        %v408 = vpop.permute.xlu0 %407
        %vm409 = vcmask 777216
        %v410 = vsel %vm409, %v404, %v406
        %v411 = vsel %vm409, %v406, %v408
        %414 = vst [vmem:[#allocation2 + $0x80] sm:$0xff] %v410
        %415 = vst [vmem:[#allocation2 + $0x88] sm:$0xff] %v411
        %416 = vrot.lane.b32.xlu0 %v303, 94
        %v417 = vpop.permute.xlu0 %416
        %418 = vrot.lane.b32.xlu0 %v304, 94
        %v419 = vpop.permute.xlu0 %418
        %420 = vrot.lane.b32.xlu0 %v305, 94
        %v421 = vpop.permute.xlu0 %420
        %vm422 = vcmask 769024
        %v423 = vsel %vm422, %v417, %v419
        %v424 = vsel %vm422, %v419, %v421
        %427 = vst [vmem:[#allocation2 + $0x90] sm:$0xff] %v423
        %428 = vst [vmem:[#allocation2 + $0x98] sm:$0xff] %v424
        %429 = vrot.lane.b32.xlu0 %v303, 93
        %v430 = vpop.permute.xlu0 %429
        %431 = vrot.lane.b32.xlu0 %v304, 93
        %v432 = vpop.permute.xlu0 %431
        %433 = vrot.lane.b32.xlu0 %v305, 93
        %v434 = vpop.permute.xlu0 %433
        %vm435 = vcmask 760832
        %v436 = vsel %vm435, %v430, %v432
        %v437 = vsel %vm435, %v432, %v434
        %440 = vst [vmem:[#allocation2 + $0xa0] sm:$0xff] %v436
        %441 = vst [vmem:[#allocation2 + $0xa8] sm:$0xff] %v437
        %442 = vrot.lane.b32.xlu0 %v303, 92
        %v443 = vpop.permute.xlu0 %442
        %444 = vrot.lane.b32.xlu0 %v304, 92
        %v445 = vpop.permute.xlu0 %444
        %446 = vrot.lane.b32.xlu0 %v305, 92
        %v447 = vpop.permute.xlu0 %446
        %vm448 = vcmask 752640
        %v449 = vsel %vm448, %v443, %v445
        %v450 = vsel %vm448, %v445, %v447
        %453 = vst [vmem:[#allocation2 + $0xb0] sm:$0xff] %v449
        %454 = vst [vmem:[#allocation2 + $0xb8] sm:$0xff] %v450
        %455 = vrot.lane.b32.xlu0 %v303, 91
        %v456 = vpop.permute.xlu0 %455
        %457 = vrot.lane.b32.xlu0 %v304, 91
        %v458 = vpop.permute.xlu0 %457
        %459 = vrot.lane.b32.xlu0 %v305, 91
        %v460 = vpop.permute.xlu0 %459
        %vm461 = vcmask 744448
        %v462 = vsel %vm461, %v456, %v458
        %v463 = vsel %vm461, %v458, %v460
        %466 = vst [vmem:[#allocation2 + $0xc0] sm:$0xff] %v462
        %467 = vst [vmem:[#allocation2 + $0xc8] sm:$0xff] %v463
        %468 = vrot.lane.b32.xlu0 %v303, 90
        %v469 = vpop.permute.xlu0 %468
        %470 = vrot.lane.b32.xlu0 %v304, 90
        %v471 = vpop.permute.xlu0 %470
        %472 = vrot.lane.b32.xlu0 %v305, 90
        %v473 = vpop.permute.xlu0 %472
        %vm474 = vcmask 736256
        %v475 = vsel %vm474, %v469, %v471
        %v476 = vsel %vm474, %v471, %v473
        %479 = vst [vmem:[#allocation2 + $0xd0] sm:$0xff] %v475
        %480 = vst [vmem:[#allocation2 + $0xd8] sm:$0xff] %v476
        %481 = vrot.lane.b32.xlu0 %v303, 64
        %v482 = vpop.permute.xlu0 %481
        %483 = vrot.lane.b32.xlu0 %v304, 64
        %v484 = vpop.permute.xlu0 %483
        %485 = vrot.lane.b32.xlu0 %v305, 64
        %v486 = vpop.permute.xlu0 %485
        %vm487 = vcmask 523264
        %v488 = vsel %vm487, %v482, %v484
        %v489 = vsel %vm487, %v484, %v486
        %492 = vst [vmem:[#allocation2 + $0xe0] sm:$0xff] %v488
        %493 = vst [vmem:[#allocation2 + $0xe8] sm:$0xff] %v489
        %494 = vrot.lane.b32.xlu0 %v303, 63
        %v495 = vpop.permute.xlu0 %494
        %496 = vrot.lane.b32.xlu0 %v304, 63
        %v497 = vpop.permute.xlu0 %496
        %498 = vrot.lane.b32.xlu0 %v305, 63
        %v499 = vpop.permute.xlu0 %498
        %vm500 = vcmask 515072
        %v501 = vsel %vm500, %v495, %v497
        %v502 = vsel %vm500, %v497, %v499
        %505 = vst [vmem:[#allocation2 + $0xf0] sm:$0xff] %v501
        %506 = vst [vmem:[#allocation2 + $0xf8] sm:$0xff] %v502
        %507 = vrot.lane.b32.xlu0 %v303, 62
        %v508 = vpop.permute.xlu0 %507
        %509 = vrot.lane.b32.xlu0 %v304, 62
        %v510 = vpop.permute.xlu0 %509
        %511 = vrot.lane.b32.xlu0 %v305, 62
        %v512 = vpop.permute.xlu0 %511
        %vm513 = vcmask 506880
        %v514 = vsel %vm513, %v508, %v510
        %v515 = vsel %vm513, %v510, %v512
        %518 = vst [vmem:[#allocation2 + $0x100] sm:$0xff] %v514
        %519 = vst [vmem:[#allocation2 + $0x108] sm:$0xff] %v515
        %520 = vrot.lane.b32.xlu0 %v303, 61
        %v521 = vpop.permute.xlu0 %520
        %522 = vrot.lane.b32.xlu0 %v304, 61
        %v523 = vpop.permute.xlu0 %522
        %524 = vrot.lane.b32.xlu0 %v305, 61
        %v525 = vpop.permute.xlu0 %524
        %vm526 = vcmask 498688
        %v527 = vsel %vm526, %v521, %v523
        %v528 = vsel %vm526, %v523, %v525
        %531 = vst [vmem:[#allocation2 + $0x110] sm:$0xff] %v527
        %532 = vst [vmem:[#allocation2 + $0x118] sm:$0xff] %v528
        %533 = vrot.lane.b32.xlu0 %v303, 60
        %v534 = vpop.permute.xlu0 %533
        %535 = vrot.lane.b32.xlu0 %v304, 60
        %v536 = vpop.permute.xlu0 %535
        %537 = vrot.lane.b32.xlu0 %v305, 60
        %v538 = vpop.permute.xlu0 %537
        %vm539 = vcmask 490496
        %v540 = vsel %vm539, %v534, %v536
        %v541 = vsel %vm539, %v536, %v538
        %544 = vst [vmem:[#allocation2 + $0x120] sm:$0xff] %v540
        %545 = vst [vmem:[#allocation2 + $0x128] sm:$0xff] %v541
        %546 = vrot.lane.b32.xlu0 %v303, 59
        %v547 = vpop.permute.xlu0 %546
        %548 = vrot.lane.b32.xlu0 %v304, 59
        %v549 = vpop.permute.xlu0 %548
        %550 = vrot.lane.b32.xlu0 %v305, 59
        %v551 = vpop.permute.xlu0 %550
        %vm552 = vcmask 482304
        %v553 = vsel %vm552, %v547, %v549
        %v554 = vsel %vm552, %v549, %v551
        %557 = vst [vmem:[#allocation2 + $0x130] sm:$0xff] %v553
        %558 = vst [vmem:[#allocation2 + $0x138] sm:$0xff] %v554
        %559 = vrot.lane.b32.xlu0 %v303, 58
        %v560 = vpop.permute.xlu0 %559
        %561 = vrot.lane.b32.xlu0 %v304, 58
        %v562 = vpop.permute.xlu0 %561
        %563 = vrot.lane.b32.xlu0 %v305, 58
        %v564 = vpop.permute.xlu0 %563
        %vm565 = vcmask 474112
        %v566 = vsel %vm565, %v560, %v562
        %v567 = vsel %vm565, %v562, %v564
        %570 = vst [vmem:[#allocation2 + $0x140] sm:$0xff] %v566
        %571 = vst [vmem:[#allocation2 + $0x148] sm:$0xff] %v567
        %572 = vrot.lane.b32.xlu0 %v303, 32
        %v573 = vpop.permute.xlu0 %572
        %574 = vrot.lane.b32.xlu0 %v304, 32
        %v575 = vpop.permute.xlu0 %574
        %576 = vrot.lane.b32.xlu0 %v305, 32
        %v577 = vpop.permute.xlu0 %576
        %vm578 = vcmask 261120
        %v579 = vsel %vm578, %v573, %v575
        %v580 = vsel %vm578, %v575, %v577
        %583 = vst [vmem:[#allocation2 + $0x150] sm:$0xff] %v579
        %584 = vst [vmem:[#allocation2 + $0x158] sm:$0xff] %v580
        %585 = vrot.lane.b32.xlu0 %v303, 31
        %v586 = vpop.permute.xlu0 %585
        %587 = vrot.lane.b32.xlu0 %v304, 31
        %v588 = vpop.permute.xlu0 %587
        %589 = vrot.lane.b32.xlu0 %v305, 31
        %v590 = vpop.permute.xlu0 %589
        %vm591 = vcmask 252928
        %v592 = vsel %vm591, %v586, %v588
        %v593 = vsel %vm591, %v588, %v590
        %596 = vst [vmem:[#allocation2 + $0x160] sm:$0xff] %v592
        %597 = vst [vmem:[#allocation2 + $0x168] sm:$0xff] %v593
        %598 = vrot.lane.b32.xlu0 %v303, 30
        %v599 = vpop.permute.xlu0 %598
        %600 = vrot.lane.b32.xlu0 %v304, 30
        %v601 = vpop.permute.xlu0 %600
        %602 = vrot.lane.b32.xlu0 %v305, 30
        %v603 = vpop.permute.xlu0 %602
        %vm604 = vcmask 244736
        %v605 = vsel %vm604, %v599, %v601
        %v606 = vsel %vm604, %v601, %v603
        %609 = vst [vmem:[#allocation2 + $0x170] sm:$0xff] %v605
        %610 = vst [vmem:[#allocation2 + $0x178] sm:$0xff] %v606
        %611 = vrot.lane.b32.xlu0 %v303, 29
        %v612 = vpop.permute.xlu0 %611
        %613 = vrot.lane.b32.xlu0 %v304, 29
        %v614 = vpop.permute.xlu0 %613
        %615 = vrot.lane.b32.xlu0 %v305, 29
        %v616 = vpop.permute.xlu0 %615
        %vm617 = vcmask 236544
        %v618 = vsel %vm617, %v612, %v614
        %v619 = vsel %vm617, %v614, %v616
        %622 = vst [vmem:[#allocation2 + $0x180] sm:$0xff] %v618
        %623 = vst [vmem:[#allocation2 + $0x188] sm:$0xff] %v619
        %624 = vrot.lane.b32.xlu0 %v303, 28
        %v625 = vpop.permute.xlu0 %624
        %626 = vrot.lane.b32.xlu0 %v304, 28
        %v627 = vpop.permute.xlu0 %626
        %628 = vrot.lane.b32.xlu0 %v305, 28
        %v629 = vpop.permute.xlu0 %628
        %vm630 = vcmask 228352
        %v631 = vsel %vm630, %v625, %v627
        %v632 = vsel %vm630, %v627, %v629
        %635 = vst [vmem:[#allocation2 + $0x190] sm:$0xff] %v631
        %636 = vst [vmem:[#allocation2 + $0x198] sm:$0xff] %v632
        %637 = vrot.lane.b32.xlu0 %v303, 27
        %v638 = vpop.permute.xlu0 %637
        %639 = vrot.lane.b32.xlu0 %v304, 27
        %v640 = vpop.permute.xlu0 %639
        %641 = vrot.lane.b32.xlu0 %v305, 27
        %v642 = vpop.permute.xlu0 %641
        %vm643 = vcmask 220160
        %v644 = vsel %vm643, %v638, %v640
        %v645 = vsel %vm643, %v640, %v642
        %648 = vst [vmem:[#allocation2 + $0x1a0] sm:$0xff] %v644
        %649 = vst [vmem:[#allocation2 + $0x1a8] sm:$0xff] %v645
        %650 = vrot.lane.b32.xlu0 %v303, 26
        %v651 = vpop.permute.xlu0 %650
        %652 = vrot.lane.b32.xlu0 %v304, 26
        %v653 = vpop.permute.xlu0 %652
        %654 = vrot.lane.b32.xlu0 %v305, 26
        %v655 = vpop.permute.xlu0 %654
        %vm656 = vcmask 211968
        %v657 = vsel %vm656, %v651, %v653
        %v658 = vsel %vm656, %v653, %v655
        %661 = vst [vmem:[#allocation2 + $0x1b0] sm:$0xff] %v657
        %662 = vst [vmem:[#allocation2 + $0x1b8] sm:$0xff] %v658
        %663 = vst [vmem:[#allocation2 + $0x1c0] sm:$0xff] %v304
        %664 = vst [vmem:[#allocation2 + $0x1c8] sm:$0xff] %v305
        %666 = vrot.lane.b32.xlu0 %v306, 127
        %v667 = vpop.permute.xlu0 %666
        %v668 = vsel %vm318, %v317, %v667
        %670 = vst [vmem:[#allocation2 + $0x1d0] sm:$0xff] %v320
        %671 = vst [vmem:[#allocation2 + $0x1d8] sm:$0xff] %v668
        %672 = vrot.lane.b32.xlu0 %v306, 126
        %v673 = vpop.permute.xlu0 %672
        %v674 = vsel %vm331, %v330, %v673
        %676 = vst [vmem:[#allocation2 + $0x1e0] sm:$0xff] %v333
        %677 = vst [vmem:[#allocation2 + $0x1e8] sm:$0xff] %v674
        %678 = vrot.lane.b32.xlu0 %v306, 125
        %v679 = vpop.permute.xlu0 %678
        %v680 = vsel %vm344, %v343, %v679
        %682 = vst [vmem:[#allocation2 + $0x1f0] sm:$0xff] %v346
        %683 = vst [vmem:[#allocation2 + $0x1f8] sm:$0xff] %v680
        %684 = vrot.lane.b32.xlu0 %v306, 124
        %v685 = vpop.permute.xlu0 %684
        %v686 = vsel %vm357, %v356, %v685
        %688 = vst [vmem:[#allocation2 + $0x200] sm:$0xff] %v359
        %689 = vst [vmem:[#allocation2 + $0x208] sm:$0xff] %v686
        %690 = vrot.lane.b32.xlu0 %v306, 123
        %v691 = vpop.permute.xlu0 %690
        %v692 = vsel %vm370, %v369, %v691
        %694 = vst [vmem:[#allocation2 + $0x210] sm:$0xff] %v372
        %695 = vst [vmem:[#allocation2 + $0x218] sm:$0xff] %v692
        %696 = vrot.lane.b32.xlu0 %v306, 122
        %v697 = vpop.permute.xlu0 %696
        %v698 = vsel %vm383, %v382, %v697
        %700 = vst [vmem:[#allocation2 + $0x220] sm:$0xff] %v385
        %701 = vst [vmem:[#allocation2 + $0x228] sm:$0xff] %v698
        %702 = vrot.lane.b32.xlu0 %v306, 96
        %v703 = vpop.permute.xlu0 %702
        %v704 = vsel %vm396, %v395, %v703
        %706 = vst [vmem:[#allocation2 + $0x230] sm:$0xff] %v398
        %707 = vst [vmem:[#allocation2 + $0x238] sm:$0xff] %v704
        %708 = vrot.lane.b32.xlu0 %v306, 95
        %v709 = vpop.permute.xlu0 %708
        %v710 = vsel %vm409, %v408, %v709
        %712 = vst [vmem:[#allocation2 + $0x240] sm:$0xff] %v411
        %713 = vst [vmem:[#allocation2 + $0x248] sm:$0xff] %v710
        %714 = vrot.lane.b32.xlu0 %v306, 94
        %v715 = vpop.permute.xlu0 %714
        %v716 = vsel %vm422, %v421, %v715
        %718 = vst [vmem:[#allocation2 + $0x250] sm:$0xff] %v424
        %719 = vst [vmem:[#allocation2 + $0x258] sm:$0xff] %v716
        %720 = vrot.lane.b32.xlu0 %v306, 93
        %v721 = vpop.permute.xlu0 %720
        %v722 = vsel %vm435, %v434, %v721
        %724 = vst [vmem:[#allocation2 + $0x260] sm:$0xff] %v437
        %725 = vst [vmem:[#allocation2 + $0x268] sm:$0xff] %v722
        %726 = vrot.lane.b32.xlu0 %v306, 92
        %v727 = vpop.permute.xlu0 %726
        %v728 = vsel %vm448, %v447, %v727
        %730 = vst [vmem:[#allocation2 + $0x270] sm:$0xff] %v450
        %731 = vst [vmem:[#allocation2 + $0x278] sm:$0xff] %v728
        %732 = vrot.lane.b32.xlu0 %v306, 91
        %v733 = vpop.permute.xlu0 %732
        %v734 = vsel %vm461, %v460, %v733
        %736 = vst [vmem:[#allocation2 + $0x280] sm:$0xff] %v463
        %737 = vst [vmem:[#allocation2 + $0x288] sm:$0xff] %v734
        %738 = vrot.lane.b32.xlu0 %v306, 90
        %v739 = vpop.permute.xlu0 %738
        %v740 = vsel %vm474, %v473, %v739
        %742 = vst [vmem:[#allocation2 + $0x290] sm:$0xff] %v476
        %743 = vst [vmem:[#allocation2 + $0x298] sm:$0xff] %v740
        %744 = vrot.lane.b32.xlu0 %v306, 64
        %v745 = vpop.permute.xlu0 %744
        %v746 = vsel %vm487, %v486, %v745
        %748 = vst [vmem:[#allocation2 + $0x2a0] sm:$0xff] %v489
        %749 = vst [vmem:[#allocation2 + $0x2a8] sm:$0xff] %v746
        %750 = vrot.lane.b32.xlu0 %v306, 63
        %v751 = vpop.permute.xlu0 %750
        %v752 = vsel %vm500, %v499, %v751
        %754 = vst [vmem:[#allocation2 + $0x2b0] sm:$0xff] %v502
        %755 = vst [vmem:[#allocation2 + $0x2b8] sm:$0xff] %v752
        %756 = vrot.lane.b32.xlu0 %v306, 62
        %v757 = vpop.permute.xlu0 %756
        %v758 = vsel %vm513, %v512, %v757
        %760 = vst [vmem:[#allocation2 + $0x2c0] sm:$0xff] %v515
        %761 = vst [vmem:[#allocation2 + $0x2c8] sm:$0xff] %v758
        %762 = vrot.lane.b32.xlu0 %v306, 61
        %v763 = vpop.permute.xlu0 %762
        %v764 = vsel %vm526, %v525, %v763
        %766 = vst [vmem:[#allocation2 + $0x2d0] sm:$0xff] %v528
        %767 = vst [vmem:[#allocation2 + $0x2d8] sm:$0xff] %v764
        %768 = vrot.lane.b32.xlu0 %v306, 60
        %v769 = vpop.permute.xlu0 %768
        %v770 = vsel %vm539, %v538, %v769
        %772 = vst [vmem:[#allocation2 + $0x2e0] sm:$0xff] %v541
        %773 = vst [vmem:[#allocation2 + $0x2e8] sm:$0xff] %v770
        %774 = vrot.lane.b32.xlu0 %v306, 59
        %v775 = vpop.permute.xlu0 %774
        %v776 = vsel %vm552, %v551, %v775
        %778 = vst [vmem:[#allocation2 + $0x2f0] sm:$0xff] %v554
        %779 = vst [vmem:[#allocation2 + $0x2f8] sm:$0xff] %v776
        %780 = vrot.lane.b32.xlu0 %v306, 58
        %v781 = vpop.permute.xlu0 %780
        %v782 = vsel %vm565, %v564, %v781
        %784 = vst [vmem:[#allocation2 + $0x300] sm:$0xff] %v567
        %785 = vst [vmem:[#allocation2 + $0x308] sm:$0xff] %v782
        %v786 = vld [vmem:[%s2] sm:$0xff]
        %v787 = vld [vmem:[%s2 + $0x8] sm:$0xff]
        %v788 = vld [vmem:[%s2 + $0x10] sm:$0xff]
        %v789 = vld [vmem:[%s2 + $0x18] sm:$0xff]
        %v790 = vld [vmem:[%s2 + $0x20] sm:$0xff]
        %v791 = vld [vmem:[%s2 + $0x28] sm:$0xff]
        %v792 = vld [vmem:[%s2 + $0x30] sm:$0xff]
        %v793 = vld [vmem:[%s2 + $0x38] sm:$0xff]
        %v794 = vld [vmem:[#allocation2] sm:$0xff]
        %v795 = vld [vmem:[#allocation2 + $0x8] sm:$0xff]
        %v796 = vld [vmem:[#allocation2 + $0x10] sm:$0xff]
        %v797 = vld [vmem:[#allocation2 + $0x18] sm:$0xff]
        %v798 = vld [vmem:[#allocation2 + $0x20] sm:$0xff]
        %v799 = vld [vmem:[#allocation2 + $0x28] sm:$0xff]
        %v800 = vld [vmem:[#allocation2 + $0x30] sm:$0xff]
        %v801 = vld [vmem:[#allocation2 + $0x38] sm:$0xff]
        %v802 = vld [vmem:[#allocation2 + $0x40] sm:$0xff]
        %v803 = vld [vmem:[#allocation2 + $0x48] sm:$0xff]
        %v804 = vld [vmem:[#allocation2 + $0x50] sm:$0xff]
        %v805 = vld [vmem:[#allocation2 + $0x58] sm:$0xff]
        %v806 = vld [vmem:[#allocation2 + $0x60] sm:$0xff]
        %v807 = vld [vmem:[#allocation2 + $0x68] sm:$0xff]
        %v808 = vld [vmem:[#allocation2 + $0x70] sm:$0xff]
        %v809 = vld [vmem:[#allocation2 + $0x78] sm:$0xff]
        %v810 = vld [vmem:[#allocation2 + $0x80] sm:$0xff]
        %v811 = vld [vmem:[#allocation2 + $0x88] sm:$0xff]
        %v812 = vld [vmem:[#allocation2 + $0x90] sm:$0xff]
        %v813 = vld [vmem:[#allocation2 + $0x98] sm:$0xff]
        %v814 = vld [vmem:[#allocation2 + $0xa0] sm:$0xff]
        %v815 = vld [vmem:[#allocation2 + $0xa8] sm:$0xff]
        %v816 = vld [vmem:[#allocation2 + $0xb0] sm:$0xff]
        %v817 = vld [vmem:[#allocation2 + $0xb8] sm:$0xff]
        %v818 = vld [vmem:[#allocation2 + $0xc0] sm:$0xff]
        %v819 = vld [vmem:[#allocation2 + $0xc8] sm:$0xff]
        %v820 = vld [vmem:[#allocation2 + $0xd0] sm:$0xff]
        %v821 = vld [vmem:[#allocation2 + $0xd8] sm:$0xff]
        %v822 = vld [vmem:[#allocation2 + $0xe0] sm:$0xff]
        %v823 = vld [vmem:[#allocation2 + $0xe8] sm:$0xff]
        %v824 = vld [vmem:[#allocation2 + $0xf0] sm:$0xff]
        %v825 = vld [vmem:[#allocation2 + $0xf8] sm:$0xff]
        %v826 = vld [vmem:[#allocation2 + $0x100] sm:$0xff]
        %v827 = vld [vmem:[#allocation2 + $0x108] sm:$0xff]
        %v828 = vld [vmem:[#allocation2 + $0x110] sm:$0xff]
        %v829 = vld [vmem:[#allocation2 + $0x118] sm:$0xff]
        %v830 = vld [vmem:[#allocation2 + $0x120] sm:$0xff]
        %v831 = vld [vmem:[#allocation2 + $0x128] sm:$0xff]
        %v832 = vld [vmem:[#allocation2 + $0x130] sm:$0xff]
        %v833 = vld [vmem:[#allocation2 + $0x138] sm:$0xff]
        %v834 = vld [vmem:[#allocation2 + $0x140] sm:$0xff]
        %v835 = vld [vmem:[#allocation2 + $0x148] sm:$0xff]
        %v836 = vld [vmem:[#allocation2 + $0x150] sm:$0xff]
        %v837 = vld [vmem:[#allocation2 + $0x158] sm:$0xff]
        %v838 = vld [vmem:[#allocation2 + $0x160] sm:$0xff]
        %v839 = vld [vmem:[#allocation2 + $0x168] sm:$0xff]
        %v840 = vld [vmem:[#allocation2 + $0x170] sm:$0xff]
        %v841 = vld [vmem:[#allocation2 + $0x178] sm:$0xff]
        %v842 = vld [vmem:[#allocation2 + $0x180] sm:$0xff]
        %v843 = vld [vmem:[#allocation2 + $0x188] sm:$0xff]
        %v844 = vld [vmem:[#allocation2 + $0x190] sm:$0xff]
        %v845 = vld [vmem:[#allocation2 + $0x198] sm:$0xff]
        %v846 = vld [vmem:[#allocation2 + $0x1a0] sm:$0xff]
        %v847 = vld [vmem:[#allocation2 + $0x1a8] sm:$0xff]
        %v848 = vld [vmem:[#allocation2 + $0x1b0] sm:$0xff]
        %v849 = vld [vmem:[#allocation2 + $0x1b8] sm:$0xff]
        %v850 = vld [vmem:[#allocation2 + $0x1c0] sm:$0xff]
        %v851 = vld [vmem:[#allocation2 + $0x1c8] sm:$0xff]
        %v852 = vld [vmem:[#allocation2 + $0x1d0] sm:$0xff]
        %v853 = vld [vmem:[#allocation2 + $0x1d8] sm:$0xff]
        %v854 = vld [vmem:[#allocation2 + $0x1e0] sm:$0xff]
        %v855 = vld [vmem:[#allocation2 + $0x1e8] sm:$0xff]
        %v856 = vld [vmem:[#allocation2 + $0x1f0] sm:$0xff]
        %v857 = vld [vmem:[#allocation2 + $0x1f8] sm:$0xff]
        %v858 = vld [vmem:[#allocation2 + $0x200] sm:$0xff]
        %v859 = vld [vmem:[#allocation2 + $0x208] sm:$0xff]
        %v860 = vld [vmem:[#allocation2 + $0x210] sm:$0xff]
        %v861 = vld [vmem:[#allocation2 + $0x218] sm:$0xff]
        %v862 = vld [vmem:[#allocation2 + $0x220] sm:$0xff]
        %v863 = vld [vmem:[#allocation2 + $0x228] sm:$0xff]
        %v864 = vld [vmem:[#allocation2 + $0x230] sm:$0xff]
        %v865 = vld [vmem:[#allocation2 + $0x238] sm:$0xff]
        %v866 = vld [vmem:[#allocation2 + $0x240] sm:$0xff]
        %v867 = vld [vmem:[#allocation2 + $0x248] sm:$0xff]
        %v868 = vld [vmem:[#allocation2 + $0x250] sm:$0xff]
        %v869 = vld [vmem:[#allocation2 + $0x258] sm:$0xff]
        %v870 = vld [vmem:[#allocation2 + $0x260] sm:$0xff]
        %v871 = vld [vmem:[#allocation2 + $0x268] sm:$0xff]
        %v872 = vld [vmem:[#allocation2 + $0x270] sm:$0xff]
        %v873 = vld [vmem:[#allocation2 + $0x278] sm:$0xff]
        %v874 = vld [vmem:[#allocation2 + $0x280] sm:$0xff]
        %v875 = vld [vmem:[#allocation2 + $0x288] sm:$0xff]
        %v876 = vld [vmem:[#allocation2 + $0x290] sm:$0xff]
        %v877 = vld [vmem:[#allocation2 + $0x298] sm:$0xff]
        %v878 = vld [vmem:[#allocation2 + $0x2a0] sm:$0xff]
        %v879 = vld [vmem:[#allocation2 + $0x2a8] sm:$0xff]
        %v880 = vld [vmem:[#allocation2 + $0x2b0] sm:$0xff]
        %v881 = vld [vmem:[#allocation2 + $0x2b8] sm:$0xff]
        %v882 = vld [vmem:[#allocation2 + $0x2c0] sm:$0xff]
        %v883 = vld [vmem:[#allocation2 + $0x2c8] sm:$0xff]
        %v884 = vld [vmem:[#allocation2 + $0x2d0] sm:$0xff]
        %v885 = vld [vmem:[#allocation2 + $0x2d8] sm:$0xff]
        %v886 = vld [vmem:[#allocation2 + $0x2e0] sm:$0xff]
        %v887 = vld [vmem:[#allocation2 + $0x2e8] sm:$0xff]
        %v888 = vld [vmem:[#allocation2 + $0x2f0] sm:$0xff]
        %v889 = vld [vmem:[#allocation2 + $0x2f8] sm:$0xff]
        %v890 = vld [vmem:[#allocation2 + $0x300] sm:$0xff]
        %v891 = vld [vmem:[#allocation2 + $0x308] sm:$0xff]
        %v892 = vld [vmem:[%s3] sm:$0xff]
        %v893 = vld [vmem:[%s3 + $0x8] sm:$0xff]
        %895 = vset.pattern.permute.xlu0 0
        %896 = vperm.xlu0 %895, %v892
        %v897 = vpop.permute.xlu0 %896
        %900 = vset.pattern.permute.xlu0 0
        %901 = vperm.xlu0 %900, %v893
        %v902 = vpop.permute.xlu0 %901
        %vm904 = vcmask 64512
        %v906 = vsel %vm904, %v789, 0
        %v909 = vsel %vm904, %v793, 0
        %911 = vmatprep.subr.mxu0 %v795
        %912 = vmatpush1.msra.mxu0 %v794
        %913 = vmatprep.subr.mxu0 %v797
        %914 = vmatpush1.msra.mxu0 %v796
        %915 = vmatprep.subr.mxu0 %v799
        %916 = vmatpush1.msra.mxu0 %v798
        %917 = vmatprep.subr.mxu0 %v801
        %918 = vmatpush1.msra.mxu0 %v800
        %919 = vmatprep.subr.mxu0 %v803
        %920 = vmatpush1.msra.mxu0 %v802
        %921 = vmatprep.subr.mxu0 %v805
        %922 = vmatpush1.msra.mxu0 %v804
        %923 = vmatprep.subr.mxu0 %v807
        %924 = vmatpush1.msra.mxu0 %v806
        %925 = vmatprep.subr.mxu0 %v809
        %926 = vmatpush1.msra.mxu0 %v808
        %927 = vmatprep.subr.mxu0 %v811
        %928 = vmatpush1.msra.mxu0 %v810
        %929 = vmatprep.subr.mxu0 %v813
        %930 = vmatpush1.msra.mxu0 %v812
        %931 = vmatprep.subr.mxu0 %v815
        %932 = vmatpush1.msra.mxu0 %v814
        %933 = vmatprep.subr.mxu0 %v817
        %934 = vmatpush1.msra.mxu0 %v816
        %935 = vmatprep.subr.mxu0 %v819
        %936 = vmatpush1.msra.mxu0 %v818
        %937 = vmatprep.subr.mxu0 %v821
        %938 = vmatpush1.msra.mxu0 %v820
        %939 = vmatprep.subr.mxu0 %v823
        %940 = vmatpush1.msra.mxu0 %v822
        %941 = vmatprep.subr.mxu0 %v825
        %942 = vmatpush1.msra.mxu0 %v824
        %943 = vmatprep.subr.mxu0 %v827
        %944 = vmatpush1.msra.mxu0 %v826
        %945 = vmatprep.subr.mxu0 %v829
        %946 = vmatpush1.msra.mxu0 %v828
        %947 = vmatprep.subr.mxu0 %v831
        %948 = vmatpush1.msra.mxu0 %v830
        %949 = vmatprep.subr.mxu0 %v833
        %950 = vmatpush1.msra.mxu0 %v832
        %951 = vmatprep.subr.mxu0 %v835
        %952 = vmatpush1.msra.mxu0 %v834
        %953 = vmatprep.subr.mxu0 %v837
        %954 = vmatpush1.msra.mxu0 %v836
        %955 = vmatprep.subr.mxu0 %v839
        %956 = vmatpush1.msra.mxu0 %v838
        %957 = vmatprep.subr.mxu0 %v841
        %958 = vmatpush1.msra.mxu0 %v840
        %959 = vmatprep.subr.mxu0 %v843
        %960 = vmatpush1.msra.mxu0 %v842
        %961 = vmatprep.subr.mxu0 %v845
        %962 = vmatpush1.msra.mxu0 %v844
        %963 = vmatprep.subr.mxu0 %v847
        %964 = vmatpush1.msra.mxu0 %v846
        %965 = vmatprep.subr.mxu0 %v849
        %966 = vmatpush1.msra.mxu0 %v848
        %967 = vmatprep.subr.mxu0 %v851
        %968 = vmatpush1.msra.mxu0 %v850
        %969 = vmatprep.subr.mxu0 %v853
        %970 = vmatpush1.msra.mxu0 %v852
        %971 = vmatprep.subr.mxu0 %v855
        %972 = vmatpush1.msra.mxu0 %v854
        %973 = vmatprep.subr.mxu0 %v857
        %974 = vmatpush1.msra.mxu0 %v856
        %975 = vmatprep.mubr.f32.mxu0 %v787
        %976 = vmatmul.mubr.f32.gmra.mrb[0].mxu0 %v786
        %v977 = vpop.f32.mrb[0].mxu0
        %v978 = vadd.f32 %v897, %v977
        %v979 = vpop.f32.mrb[0].mxu0
        %v980 = vadd.f32 %v897, %v979
        %981 = vmatprep.mubr.f32.mxu0 %v791
        %982 = vmatmul.mubr.f32.gmra.mrb[0].mxu0 %v790
        %v983 = vpop.f32.mrb[0].mxu0
        %v984 = vadd.f32 %v902, %v983
        %v985 = vpop.f32.mrb[0].mxu0
        %v986 = vadd.f32 %v902, %v985
        %987 = vdwg.mxu0
        %988 = vmatprep.subr.mxu0 %v859
        %989 = vmatpush1.msra.mxu0 %v858
        %990 = vmatprep.subr.mxu0 %v861
        %991 = vmatpush1.msra.mxu0 %v860
        %992 = vmatprep.subr.mxu0 %v863
        %993 = vmatpush1.msra.mxu0 %v862
        %994 = vmatprep.subr.mxu0 %v865
        %995 = vmatpush1.msra.mxu0 %v864
        %996 = vmatprep.subr.mxu0 %v867
        %997 = vmatpush1.msra.mxu0 %v866
        %998 = vmatprep.subr.mxu0 %v869
        %999 = vmatpush1.msra.mxu0 %v868
        %1000 = vmatprep.subr.mxu0 %v871
        %1001 = vmatpush1.msra.mxu0 %v870
        %1002 = vmatprep.subr.mxu0 %v873
        %1003 = vmatpush1.msra.mxu0 %v872
        %1004 = vmatprep.subr.mxu0 %v875
        %1005 = vmatpush1.msra.mxu0 %v874
        %1006 = vmatprep.subr.mxu0 %v877
        %1007 = vmatpush1.msra.mxu0 %v876
        %1008 = vmatprep.subr.mxu0 %v879
        %1009 = vmatpush1.msra.mxu0 %v878
        %1010 = vmatprep.subr.mxu0 %v881
        %1011 = vmatpush1.msra.mxu0 %v880
        %1012 = vmatprep.subr.mxu0 %v883
        %1013 = vmatpush1.msra.mxu0 %v882
        %1014 = vmatprep.subr.mxu0 %v885
        %1015 = vmatpush1.msra.mxu0 %v884
        %1016 = vmatprep.subr.mxu0 %v887
        %1017 = vmatpush1.msra.mxu0 %v886
        %1018 = vmatprep.subr.mxu0 %v889
        %1019 = vmatpush1.msra.mxu0 %v888
        %1020 = vmatprep.subr.mxu0 %v891
        %1021 = vmatpush1.msra.mxu0 %v890
        %1022 = vmatprep.subr.mxu0 0.0
        %1023 = vmatpush1.msra.mxu0 0.0
        %1024 = vmatprep.subr.mxu0 0.0
        %1025 = vmatpush1.msra.mxu0 0.0
        %1026 = vmatprep.subr.mxu0 0.0
        %1027 = vmatpush1.msra.mxu0 0.0
        %1028 = vmatprep.subr.mxu0 0.0
        %1029 = vmatpush1.msra.mxu0 0.0
        %1030 = vmatprep.subr.mxu0 0.0
        %1031 = vmatpush1.msra.mxu0 0.0
        %1032 = vmatprep.subr.mxu0 0.0
        %1033 = vmatpush1.msra.mxu0 0.0
        %1034 = vmatprep.subr.mxu0 0.0
        %1035 = vmatpush1.msra.mxu0 0.0
        %1036 = vmatprep.subr.mxu0 0.0
        %1037 = vmatpush1.msra.mxu0 0.0
        %1038 = vmatprep.subr.mxu0 0.0
        %1039 = vmatpush1.msra.mxu0 0.0
        %1040 = vmatprep.subr.mxu0 0.0
        %1041 = vmatpush1.msra.mxu0 0.0
        %1042 = vmatprep.subr.mxu0 0.0
        %1043 = vmatpush1.msra.mxu0 0.0
        %1044 = vmatprep.subr.mxu0 0.0
        %1045 = vmatpush1.msra.mxu0 0.0
        %1046 = vmatprep.subr.mxu0 0.0
        %1047 = vmatpush1.msra.mxu0 0.0
        %1048 = vmatprep.subr.mxu0 0.0
        %1049 = vmatpush1.msra.mxu0 0.0
        %1050 = vmatprep.subr.mxu0 0.0
        %1051 = vmatpush1.msra.mxu0 0.0
        %1052 = vmatprep.mubr.f32.mxu0 %v906
        %1053 = vmatmul.mubr.f32.gmra.mrb[0].mxu0 %v788
        %v1054 = vpop.f32.mrb[0].mxu0
        %v1055 = vadd.f32 %v978, %v1054
        %v1056 = vpop.f32.mrb[0].mxu0
        %v1057 = vadd.f32 %v980, %v1056
        %1058 = vmatprep.mubr.f32.mxu0 %v909
        %1059 = vmatmul.mubr.f32.gmra.mrb[0].mxu0 %v792
        %v1060 = vpop.f32.mrb[0].mxu0
        %v1061 = vadd.f32 %v984, %v1060
        %v1062 = vpop.f32.mrb[0].mxu0
        %v1063 = vadd.f32 %v986, %v1062
        %1064 = vdwg.mxu0
        %v1067 = vrot.slane %v1055, 4
        %v1068 = vrot.slane %v1057, 4
        %v1071 = vmax.f32 %v1055, %v1067
        %v1072 = vmax.f32 %v1057, %v1068
        %v1075 = vrot.slane %v1061, 4
        %v1076 = vrot.slane %v1063, 4
        %v1079 = vmax.f32 %v1061, %v1075
        %v1080 = vmax.f32 %v1063, %v1076
        %v1081 = vmax.f32 %v1071, %v1079
        %v1082 = vmax.f32 %v1072, %v1080
        %v1083 = vld [vmem:[%s4] sm:$0xf]
        %vm1084 = vcmp.gt.f32.partialorder %v1081, 0.0
        %vm1085 = vcmp.gt.f32.partialorder %v1082, 0.0
        %1087 = vset.pattern.permute.xlu0 0
        %1088 = vperm.xlu0 %1087, %v1083
        %v1089 = vpop.permute.xlu0 %1088
        %v1091 = vmul.f32 %v1081, %v1089
        %v1092 = vmul.f32 %v1082, %v1089
        %v1093 = vsel %vm1084, %v1081, %v1091
        %v1094 = vsel %vm1085, %v1082, %v1092
        %v1095 = vmax.f32 %v1093, 0.0
        %v1096 = vmax.f32 %v1094, 0.0
        %v1097 = vmin.f32 %v1095, 1.0
        %v1098 = vmin.f32 %v1096, 1.0
        %v1099 = vld [vmem:[%s293] sm:$0x77]
        %vm1100 = vcmp.lt.f32.partialorder %v1097, 1.0
        %vm1101 = vcmp.lt.f32.partialorder %v1098, 1.0
        %v1102 = vsel %vm1100, 1, 0
        %v1103 = vsel %vm1101, 1, 0
        %v1104 = vcvt.s32.f32 %v1102
        %v1105 = vcvt.s32.f32 %v1103
        %vm1106 = vcmp.eq.f32.partialorder %v1097, 1.0
        %vm1107 = vcmp.eq.f32.partialorder %v1098, 1.0
        %v1108 = vsel %vm1106, 1, 0
        %v1109 = vsel %vm1107, 1, 0
        %v1110 = vcvt.s32.f32 %v1108
        %v1111 = vcvt.s32.f32 %v1109
        %v1112 = vsub.f32 1.0, %v1097
        %v1113 = vsub.f32 1.0, %v1098
        %v1114 = vadd.f32 %v1112, 1e-08
        %v1115 = vadd.f32 %v1113, 1e-08
        %v1116 = vrcp.pop %v1114
        %v1117 = vrcp.pop %v1115
        %v1118 = vlaneseq
        %v1119 = vshrl.u32 %v1118, 7
        %v1120 = vsub.s32 0, %v1119
        %v1121 = vrot.slane %v1097, %v1120
        %v1122 = vlaneseq
        %v1123 = vshrl.u32 %v1122, 7
        %v1124 = vsub.s32 0, %v1123
        %v1125 = vrot.slane %v1098, %v1124
        %v1126 = vmul.f32 %v1093, %v1121
        %v1127 = vmul.f32 %v1094, %v1125
        %v1130 = vcombine.low %v1126, %v1127
        %v1131 = vrot.slane %v1130, 5
        %v1132 = vrot.slane %v1131, 4
        %v1134 = vsub.f32 %v1099, %v1132
        %v1135 = vlaneseq
        %v1136 = vshrl.u32 %v1135, 7
        %v1137 = vsub.s32 0, %v1136
        %v1138 = vrot.slane %v1104, %v1137
        %v1139 = vlaneseq
        %v1140 = vshrl.u32 %v1139, 7
        %v1141 = vsub.s32 0, %v1140
        %v1142 = vrot.slane %v1105, %v1141
        %v1144 = vcombine.high %v1134, %v1134
        %v1146 = vmul.f32 %v1138, %v1134
        %v1147 = vmul.f32 %v1142, %v1144
        %v1148 = vlaneseq
        %v1149 = vshrl.u32 %v1148, 7
        %v1150 = vsub.s32 0, %v1149
        %v1151 = vrot.slane %v1116, %v1150
        %v1152 = vlaneseq
        %v1153 = vshrl.u32 %v1152, 7
        %v1154 = vsub.s32 0, %v1153
        %v1155 = vrot.slane %v1117, %v1154
        %v1156 = vmul.f32 %v1146, %v1151
        %v1157 = vmul.f32 %v1147, %v1155
        %v1158 = vlaneseq
        %v1159 = vshrl.u32 %v1158, 7
        %v1160 = vsub.s32 0, %v1159
        %v1161 = vrot.slane %v1110, %v1160
        %v1162 = vlaneseq
        %v1163 = vshrl.u32 %v1162, 7
        %v1164 = vsub.s32 0, %v1163
        %v1165 = vrot.slane %v1111, %v1164
        %v1167 = vcombine.high %v1099, %v1099
        %v1169 = vmul.f32 %v1161, %v1099
        %v1170 = vmul.f32 %v1165, %v1167
        %v1171 = vadd.f32 %v1156, %v1169
        %v1172 = vadd.f32 %v1157, %v1170
        %v1173 = vmax.f32 %v1171, 0.0
        %v1174 = vmax.f32 %v1172, 0.0
        %v1175 = vmin.f32 %v1173, 1.0
        %v1176 = vmin.f32 %v1174, 1.0
        %v1179 = vrot.slane %v1097, 5
        %v1180 = vrot.slane %v1098, 5
        %v1185 = vrot.slane %v1093, 5
        %v1186 = vrot.slane %v1094, 5
        %vm1189 = vcmask 1042432
        %v1190 = vsel %vm1189, %v1175, %v1179
        %v1191 = vsel %vm1189, %v1176, %v1180
        %vm1192 = vcmask 1043456
        %v1193 = vsel %vm1192, %v1190, %v1185
        %v1194 = vsel %vm1192, %v1191, %v1186
        %1195 = vst [vmem:[%s302] sm:$0x7f] %v1193
        %1196 = vst [vmem:[%s302 + $0x8] sm:$0x7f] %v1194
        %p1197 = scmp.lt.s32.totalorder %s23, 1
        %s1198 = scalar_select %p1197, %s23, 1
        %p1199 = scmp.lt.s32.totalorder %s24, 1
        %s1200 = scalar_select %p1199, %s24, 1
        %s1201 = smul.addr %s1200, 2
        %s1202 = smul.addr %s1198, 4
        %s1203 = sadd.s32 %s1201, %s1202
        %s1204 = smul.addr %s1203, 8
        %s1205 = scalar_lea.vmem %s5, %s1204
        // Predicated region
        $region45: #{tpu_custom_call.1} parent=39 // pred_check
          %p1206 = pneg %p170
        $region46: #{tpu_custom_call.1} parent=39 // pred_check_branch
          %1208 = sbr.rel (%p1206) target = $region48
        $region47: #{tpu_custom_call.1} parent=39 // pred_region
          _
        $region48: #{tpu_custom_call.1} parent=39 // pred_fallthru
          _
      $region40: #{tpu_custom_call.1} parent=5 // pred_fallthru
        _
      %p1209 = scmp.le.s32.totalorder 2, %s14
      // Predicated region
      $region49: #{tpu_custom_call.1} parent=5 // pred_check
        %p1210 = pneg %p1209
      $region50: #{tpu_custom_call.1} parent=5 // pred_check_branch
        %1212 = sbr.rel (%p1210) target = $region52
      $region51: #{tpu_custom_call.1} parent=5 // pred_region
        %s1213 = ssub.s32 %s14, 2
        // Predicated region
        $region53: #{tpu_custom_call.1} parent=51 // pred_check
          %p1214 = pneg %p176
        $region54: #{tpu_custom_call.1} parent=51 // pred_check_branch
          %1216 = sbr.rel (%p1214) target = $region56
        $region55: #{tpu_custom_call.1} parent=51 // pred_region
          %p1217 = scmp.lt.s32.totalorder %s25, 1
          %s1218 = scalar_select %p1217, %s25, 1
          %p1219 = scmp.lt.s32.totalorder %s26, 1
          %s1220 = scalar_select %p1219, %s26, 1
          %s1221 = smul.addr %s1220, 2
          %s1222 = smul.addr %s1218, 4
          %s1223 = sadd.s32 %s1221, %s1222
          %s1224 = smul.addr %s1223, 8
          %s1225 = scalar_lea.vmem %s5, %s1224
        $region56: #{tpu_custom_call.1} parent=51 // pred_fallthru
          _
      $region52: #{tpu_custom_call.1} parent=5 // pred_fallthru
        _
    $region6: #{tpu_custom_call.1} parent=1 // loop_footer
      %s18 = sadd.s32 1, %s14
    $region7: #{tpu_custom_call.1} parent=1 // loop_footer_branch
      %13 = sbr.rel target = $region3
    $region8: #{tpu_custom_call.1} parent=1 // loop_exit
      _
    %1226 = vsyncpa [#allocation4], 1
    %s1227 = scalar_lea.sflag [#allocation4], 1
    %1228 = vsyncpa %s1227, 1

</llo_original>
